<compile_context>
chip_gen: v7x
topology: tpu7x:2x2x1
jax: 0.10.0
libtpu: 0.0.40
codegen_flags: <defaults>
</compile_context>

<pallas_src>
import functools

import jax
import jax.numpy as jnp
from jax import lax
from jax.experimental import pallas as pl
from jax.experimental.pallas import tpu as pltpu


def _attn_kernel(*refs, num_heads, store_attn):
    if store_attn:
        (xq_ref, x_ref, wq_ref, wkv_ref, wp_ref, bp_ref,
         y_ref, attn_ref, kv_ref, o_ref) = refs
    else:
        (xq_ref, x_ref, wq_ref, wkv_ref, wp_ref, bp_ref,
         y_ref, kv_ref, o_ref) = refs
        attn_ref = None

    H = num_heads
    _, N, C = x_ref.shape
    D = C // H
    qi = pl.program_id(1)

    # K/V for the whole sequence: computed once per batch element (qi == 0),
    # cached in VMEM scratch (bf16) and reused by every query tile.
    @pl.when(qi == 0)
    def _():
        kv = jnp.dot(x_ref[0], wkv_ref[...],
                     preferred_element_type=jnp.float32)           # (N, 2C) f32
        kv_ref[...] = kv.astype(kv_ref.dtype)

    # Q for this query tile; the qk scale is pre-folded into wq in the wrapper.
    q_all = jnp.dot(xq_ref[0], wq_ref[...],
                    preferred_element_type=jnp.float32
                    ).astype(jnp.bfloat16)                          # (TQ, C) bf16

    for h in range(H):                       # static unroll -> static slices
        q = q_all[:, h * D:(h + 1) * D]                             # (TQ, D) bf16
        k = kv_ref[:, h * D:(h + 1) * D]                            # (N, D)  bf16
        v = kv_ref[:, C + h * D:C + (h + 1) * D]                    # (N, D)  bf16

        # q @ k^T without materializing a transpose (contract dim 1 of both).
        s = lax.dot_general(q, k, (((1,), (1,)), ((), ())),
                            preferred_element_type=jnp.float32)     # (TQ, N) f32
        s = s - jnp.max(s, axis=-1, keepdims=True)
        e = jnp.exp(s)
        p = e * pl.reciprocal(jnp.sum(e, axis=-1, keepdims=True), approx=True)

        if store_attn:
            attn_ref[0, h] = p.astype(attn_ref.dtype)

        # Write this head's output slice straight into the (TQ, C) bf16 scratch.
        o_ref[:, h * D:(h + 1) * D] = jnp.dot(
            p.astype(jnp.bfloat16), v,
            preferred_element_type=jnp.float32).astype(o_ref.dtype)

    # One full-width projection matmul + bias for this query tile.
    y = jnp.dot(o_ref[...], wp_ref[...], preferred_element_type=jnp.float32)
    y_ref[0] = (y + bp_ref[...]).astype(y_ref.dtype)


def _vmem_limit_bytes():
    """~75% of physical VMEM (96 MiB on v5e/v6e, 48 MiB on v7x)."""
    try:
        cap = pltpu.get_tpu_info().vmem_capacity_bytes
    except Exception:
        cap = 64 * 1024 * 1024
    return int(cap * 3 // 4)


def attention_forward(x, w_qkv, w_proj, b_proj, num_heads, *,
                      qk_scale=None,
                      q_tile=None,
                      return_attn=True,
                      attn_dtype=jnp.bfloat16,
                      out_dtype=jnp.float32):
    """Pallas implementation of Attention.forward.  Returns (y, attn|None)."""
    B, N, C = x.shape
    H = num_heads
    D = C // H
    scale = qk_scale if qk_scale is not None else D ** (-0.5)

    # Query-tile size: either the full sequence or a sublane-aligned divisor.
    if q_tile is None:
        q_tile = N if N <= 256 else 256
    if N % q_tile != 0 or (q_tile != N and q_tile % 8 != 0):
        raise ValueError(f"q_tile={q_tile} must divide N={N} and be a multiple "
                         "of 8 (or equal N)")
    nq = N // q_tile

    # --- parameter plumbing only (transpose + cast + scale fold, no compute) ---
    x_bf = x.astype(jnp.bfloat16)
    wq_t = (jnp.transpose(w_qkv[:C]) * scale).astype(jnp.bfloat16)   # (C, C)
    wkv_t = jnp.transpose(w_qkv[C:]).astype(jnp.bfloat16)            # (C, 2C) [k|v]
    wp_t = jnp.transpose(w_proj).astype(jnp.bfloat16)                # (C, C)
    bp = b_proj.reshape(1, C).astype(jnp.float32)

    kernel = functools.partial(_attn_kernel, num_heads=H, store_attn=return_attn)

    in_specs = [
        pl.BlockSpec((1, q_tile, C), lambda b, qi: (b, qi, 0)),   # x query tile
        pl.BlockSpec((1, N, C), lambda b, qi: (b, 0, 0)),         # x full (K/V)
        pl.BlockSpec((C, C), lambda b, qi: (0, 0)),               # Wq^T * scale
        pl.BlockSpec((C, 2 * C), lambda b, qi: (0, 0)),           # Wkv^T
        pl.BlockSpec((C, C), lambda b, qi: (0, 0)),               # Wproj^T
        pl.BlockSpec((1, C), lambda b, qi: (0, 0)),               # proj bias
    ]
    y_shape = jax.ShapeDtypeStruct((B, N, C), out_dtype)
    y_spec = pl.BlockSpec((1, q_tile, C), lambda b, qi: (b, qi, 0))

    if return_attn:
        out_shape = (y_shape, jax.ShapeDtypeStruct((B, H, N, N), attn_dtype))
        out_specs = [y_spec,
                     pl.BlockSpec((1, H, q_tile, N), lambda b, qi: (b, 0, qi, 0))]
    else:
        out_shape = y_shape
        out_specs = y_spec

    scratch_shapes = [
        pltpu.VMEM((N, 2 * C), jnp.bfloat16),      # cached K|V for batch element
        pltpu.VMEM((q_tile, C), jnp.bfloat16),     # head-concatenated output
    ]

    # Advisory cost estimate for the XLA scheduler.
    flops = 2 * B * N * C * (3 * C) + 2 * B * N * C * C + 4 * B * N * N * C
    transcendentals = B * H * N * N
    bytes_accessed = (2 * B * N * C * 2                       # x (bf16, read twice)
                      + (4 * C * C + C) * 2                   # weights + bias
                      + B * N * C * jnp.dtype(out_dtype).itemsize)
    if return_attn:
        bytes_accessed += B * H * N * N * jnp.dtype(attn_dtype).itemsize

    out = pl.pallas_call(
        kernel,
        out_shape=out_shape,
        grid_spec=pltpu.PrefetchScalarGridSpec(
            num_scalar_prefetch=0,
            grid=(B, nq),
            in_specs=in_specs,
            out_specs=out_specs,
            scratch_shapes=scratch_shapes,
        ),
        compiler_params=pltpu.CompilerParams(
            dimension_semantics=("parallel", "arbitrary"),
            vmem_limit_bytes=_vmem_limit_bytes()),
        cost_estimate=pl.CostEstimate(flops=flops,
                                      transcendentals=transcendentals,
                                      bytes_accessed=bytes_accessed),
    )(x_bf, x_bf, wq_t, wkv_t, wp_t, bp)

    if return_attn:
        y, attn = out
        return y, attn
    return out, None


def attention_reference(x, w_qkv, w_proj, b_proj, num_heads):
    """Pure-JAX reference mirroring the PyTorch forward (f32, highest precision)."""
    B, N, C = x.shape
    H = num_heads
    D = C // H
    scale = D ** (-0.5)
    hp = jax.lax.Precision.HIGHEST
    qkv = jnp.dot(x, w_qkv.T, precision=hp)                  # (B, N, 3C)
    qkv = qkv.reshape(B, N, 3, H, D).transpose(2, 0, 3, 1, 4)
    q, k, v = qkv[0], qkv[1], qkv[2]                         # (B, H, N, D)
    attn = jnp.einsum("bhnd,bhmd->bhnm", q, k, precision=hp) * scale
    attn = jax.nn.softmax(attn, axis=-1)
    o = jnp.einsum("bhnm,bhmd->bhnd", attn, v, precision=hp)
    o = o.transpose(0, 2, 1, 3).reshape(B, N, C)
    y = jnp.dot(o, w_proj.T, precision=hp) + b_proj
    return y, attn


if __name__ == "__main__":
    def run_case(B, N, C, H, q_tile=None):
        key = jax.random.PRNGKey(0)
        kx, kq, kp, kb = jax.random.split(key, 4)
        x = jax.random.normal(kx, (B, N, C), dtype=jnp.float32)
        # nn.Linear(dim, 3*dim, bias=False) weight: (3C, C); nn.Linear(dim, dim): (C, C)+(C,)
        w_qkv = 0.05 * jax.random.normal(kq, (3 * C, C), dtype=jnp.float32)
        w_proj = 0.05 * jax.random.normal(kp, (C, C), dtype=jnp.float32)
        b_proj = 0.05 * jax.random.normal(kb, (C,), dtype=jnp.float32)

        y_ref, attn_ref = attention_reference(x, w_qkv, w_proj, b_proj, H)

        # Full path: y + attention probabilities (bf16 attn output).
        y, attn = attention_forward(x, w_qkv, w_proj, b_proj, H, q_tile=q_tile)
        jax.block_until_ready((y, attn))
        assert jnp.allclose(y, y_ref, atol=2e-2, rtol=2e-2), "proj output mismatch"
        assert jnp.allclose(attn.astype(jnp.float32), attn_ref,
                            atol=2e-2, rtol=2e-2), "attn mismatch"

        # y-only path (skips the O(H*N^2) attention writeback entirely).
        y2, attn2 = attention_forward(x, w_qkv, w_proj, b_proj, H,
                                      q_tile=q_tile, return_attn=False)
        jax.block_until_ready(y2)
        assert attn2 is None
        assert jnp.allclose(y2, y_ref, atol=2e-2, rtol=2e-2), \
            "proj output mismatch (no-attn path)"

    # Small correctness-only shapes (perf-wise meaningless at this size).
    run_case(B=2, N=8, C=64, H=8)              # single query tile
    run_case(B=2, N=16, C=64, H=8, q_tile=8)   # multi query tile (KV cached in scratch)

    print("KERNEL_OK")
</pallas_src>

<mosaic_0001>
module attributes {stable_mosaic.version = 11 : i64} {
  func.func @_attn_kernel(%arg0: i32, %arg1: i32, %arg2: memref<1x8x64xbf16, #tpu.memory_space<vmem>>, %arg3: memref<1x8x64xbf16, #tpu.memory_space<vmem>>, %arg4: memref<64x64xbf16, #tpu.memory_space<vmem>>, %arg5: memref<64x128xbf16, #tpu.memory_space<vmem>>, %arg6: memref<64x64xbf16, #tpu.memory_space<vmem>>, %arg7: memref<1x64xf32, #tpu.memory_space<vmem>>, %arg8: memref<1x8x64xf32, #tpu.memory_space<vmem>>, %arg9: memref<1x8x8x8xbf16, #tpu.memory_space<vmem>>, %arg10: memref<8x128xbf16, #tpu.memory_space<vmem>>, %arg11: memref<8x64xbf16, #tpu.memory_space<vmem>>) attributes {dimension_semantics = [#tpu.dimension_semantics<parallel>, #tpu.dimension_semantics<arbitrary>], iteration_bounds = array<i64: 2, 1>, scalar_prefetch = 0 : i64, scratch_operands = 2 : i64, tpu.core_type = #tpu.core_type<tc>, window_params = [{transform_indices = @transform_0, window_bounds = array<i64: 1, 8, 64>}, {transform_indices = @transform_1, window_bounds = array<i64: 1, 8, 64>}, {pipeline_mode = #tpu.pipeline_mode<synchronous>, transform_indices = @transform_2, window_bounds = array<i64: 64, 64>}, {pipeline_mode = #tpu.pipeline_mode<synchronous>, transform_indices = @transform_3, window_bounds = array<i64: 64, 128>}, {pipeline_mode = #tpu.pipeline_mode<synchronous>, transform_indices = @transform_4, window_bounds = array<i64: 64, 64>}, {pipeline_mode = #tpu.pipeline_mode<synchronous>, transform_indices = @transform_5, window_bounds = array<i64: 1, 64>}, {transform_indices = @transform_6, window_bounds = array<i64: 1, 8, 64>}, {transform_indices = @transform_7, window_bounds = array<i64: 1, 8, 8, 8>}]} {
    %c0_i32 = arith.constant 0 : i32
    %0 = arith.cmpi eq, %arg1, %c0_i32 : i32
    %1 = arith.extui %0 : i1 to i32
    %c0_i32_0 = arith.constant 0 : i32
    %2 = arith.cmpi ne, %1, %c0_i32_0 : i32
    scf.if %2 {
      %c0_105 = arith.constant 0 : index
      %c0_106 = arith.constant 0 : index
      %c0_107 = arith.constant 0 : index
      %193 = vector.load %arg3[%c0_105, %c0_106, %c0_107] : memref<1x8x64xbf16, #tpu.memory_space<vmem>>, vector<1x8x64xbf16>
      %194 = vector.shape_cast %193 : vector<1x8x64xbf16> to vector<8x64xbf16>
      %c0_108 = arith.constant 0 : index
      %c0_109 = arith.constant 0 : index
      %195 = vector.load %arg5[%c0_108, %c0_109] : memref<64x128xbf16, #tpu.memory_space<vmem>>, vector<64x128xbf16>
      %cst_110 = arith.constant dense<0.000000e+00> : vector<8x128xf32>
      %196 = tpu.matmul %194, %195, %cst_110 {dimension_numbers = #tpu.dot_dimension_numbers<[1], [0], [0], [1], [0, 0, 1, 1], [], []>} : vector<8x64xbf16>, vector<64x128xbf16>, vector<8x128xf32> -> vector<8x128xf32>
      %197 = arith.truncf %196 : vector<8x128xf32> to vector<8x128xbf16>
      %c0_111 = arith.constant 0 : index
      %c0_112 = arith.constant 0 : index
      %198 = vector.load %arg10[%c0_111, %c0_112] : memref<8x128xbf16, #tpu.memory_space<vmem>>, vector<8x128xbf16>
      tpu.vector_store %arg10[%c0_111, %c0_112], %197 {strides = array<i32>} : memref<8x128xbf16, #tpu.memory_space<vmem>>, vector<8x128xbf16>,
    } else {
    }
    %c0 = arith.constant 0 : index
    %c0_1 = arith.constant 0 : index
    %c0_2 = arith.constant 0 : index
    %3 = vector.load %arg2[%c0, %c0_1, %c0_2] : memref<1x8x64xbf16, #tpu.memory_space<vmem>>, vector<1x8x64xbf16>
    %4 = vector.shape_cast %3 : vector<1x8x64xbf16> to vector<8x64xbf16>
    %c0_3 = arith.constant 0 : index
    %c0_4 = arith.constant 0 : index
    %5 = vector.load %arg4[%c0_3, %c0_4] : memref<64x64xbf16, #tpu.memory_space<vmem>>, vector<64x64xbf16>
    %cst = arith.constant dense<0.000000e+00> : vector<8x64xf32>
    %6 = tpu.matmul %4, %5, %cst {dimension_numbers = #tpu.dot_dimension_numbers<[1], [0], [0], [1], [0, 0, 1, 1], [], []>} : vector<8x64xbf16>, vector<64x64xbf16>, vector<8x64xf32> -> vector<8x64xf32>
    %7 = arith.truncf %6 : vector<8x64xf32> to vector<8x64xbf16>
    %8 = vector.extract_strided_slice %7 {offsets = [0, 0], sizes = [8, 8], strides = [1, 1]} : vector<8x64xbf16> to vector<8x8xbf16>
    %c0_5 = arith.constant 0 : index
    %c0_6 = arith.constant 0 : index
    %9 = vector.load %arg10[%c0_5, %c0_6] : memref<8x128xbf16, #tpu.memory_space<vmem>>, vector<8x8xbf16>
    %c0_7 = arith.constant 0 : index
    %c64 = arith.constant 64 : index
    %10 = vector.load %arg10[%c0_7, %c64] : memref<8x128xbf16, #tpu.memory_space<vmem>>, vector<8x8xbf16>
    %cst_8 = arith.constant dense<0.000000e+00> : vector<8x8xf32>
    %11 = tpu.matmul %8, %9, %cst_8 {dimension_numbers = #tpu.dot_dimension_numbers<[1], [1], [0], [0], [0, 0, 1, 0], [], []>} : vector<8x8xbf16>, vector<8x8xbf16>, vector<8x8xf32> -> vector<8x8xf32>
    %cst_9 = arith.constant dense<0xFF800000> : vector<8xf32>
    %12 = vector.multi_reduction <maximumf>, %11, %cst_9 [1] : vector<8x8xf32> to vector<8xf32>
    %13 = vector.shape_cast %12 : vector<8xf32> to vector<8x1xf32>
    %14 = vector.broadcast %13 : vector<8x1xf32> to vector<8x8xf32>
    %15 = arith.subf %11, %14 : vector<8x8xf32>
    %16 = math.exp %15 : vector<8x8xf32>
    %cst_10 = arith.constant dense<0.000000e+00> : vector<8xf32>
    %17 = vector.multi_reduction <add>, %16, %cst_10 [1] : vector<8x8xf32> to vector<8xf32>
    %18 = vector.shape_cast %17 : vector<8xf32> to vector<8x1xf32>
    %19 = tpu.reciprocal %18 {approx = true} : vector<8x1xf32> -> vector<8x1xf32>
    %20 = vector.broadcast %19 : vector<8x1xf32> to vector<8x8xf32>
    %21 = arith.mulf %16, %20 : vector<8x8xf32>
    %22 = arith.truncf %21 : vector<8x8xf32> to vector<8x8xbf16>
    %c0_11 = arith.constant 0 : index
    %c0_12 = arith.constant 0 : index
    %c0_13 = arith.constant 0 : index
    %c0_14 = arith.constant 0 : index
    %23 = vector.load %arg9[%c0_11, %c0_12, %c0_13, %c0_14] : memref<1x8x8x8xbf16, #tpu.memory_space<vmem>>, vector<1x1x8x8xbf16>
    %24 = vector.shape_cast %23 : vector<1x1x8x8xbf16> to vector<8x8xbf16>
    %25 = vector.shape_cast %22 : vector<8x8xbf16> to vector<1x1x8x8xbf16>
    tpu.vector_store %arg9[%c0_11, %c0_12, %c0_13, %c0_14], %25 {strides = array<i32>} : memref<1x8x8x8xbf16, #tpu.memory_space<vmem>>, vector<1x1x8x8xbf16>,
    %26 = arith.truncf %21 : vector<8x8xf32> to vector<8x8xbf16>
    %cst_15 = arith.constant dense<0.000000e+00> : vector<8x8xf32>
    %27 = tpu.matmul %26, %10, %cst_15 {dimension_numbers = #tpu.dot_dimension_numbers<[1], [0], [0], [1], [0, 0, 1, 1], [], []>} : vector<8x8xbf16>, vector<8x8xbf16>, vector<8x8xf32> -> vector<8x8xf32>
    %28 = arith.truncf %27 : vector<8x8xf32> to vector<8x8xbf16>
    %c0_16 = arith.constant 0 : index
    %c0_17 = arith.constant 0 : index
    %29 = vector.load %arg11[%c0_16, %c0_17] : memref<8x64xbf16, #tpu.memory_space<vmem>>, vector<8x8xbf16>
    tpu.vector_store %arg11[%c0_16, %c0_17], %28 {strides = array<i32>} : memref<8x64xbf16, #tpu.memory_space<vmem>>, vector<8x8xbf16>,
    %30 = vector.extract_strided_slice %7 {offsets = [0, 8], sizes = [8, 8], strides = [1, 1]} : vector<8x64xbf16> to vector<8x8xbf16>
    %c0_18 = arith.constant 0 : index
    %c8 = arith.constant 8 : index
    %31 = vector.load %arg10[%c0_18, %c8] : memref<8x128xbf16, #tpu.memory_space<vmem>>, vector<8x8xbf16>
    %c0_19 = arith.constant 0 : index
    %c72 = arith.constant 72 : index
    %32 = vector.load %arg10[%c0_19, %c72] : memref<8x128xbf16, #tpu.memory_space<vmem>>, vector<8x8xbf16>
    %cst_20 = arith.constant dense<0.000000e+00> : vector<8x8xf32>
    %33 = tpu.matmul %30, %31, %cst_20 {dimension_numbers = #tpu.dot_dimension_numbers<[1], [1], [0], [0], [0, 0, 1, 0], [], []>} : vector<8x8xbf16>, vector<8x8xbf16>, vector<8x8xf32> -> vector<8x8xf32>
    %cst_21 = arith.constant dense<0xFF800000> : vector<8xf32>
    %34 = vector.multi_reduction <maximumf>, %33, %cst_21 [1] : vector<8x8xf32> to vector<8xf32>
    %35 = vector.shape_cast %34 : vector<8xf32> to vector<8x1xf32>
    %36 = vector.broadcast %35 : vector<8x1xf32> to vector<8x8xf32>
    %37 = arith.subf %33, %36 : vector<8x8xf32>
    %38 = math.exp %37 : vector<8x8xf32>
    %cst_22 = arith.constant dense<0.000000e+00> : vector<8xf32>
    %39 = vector.multi_reduction <add>, %38, %cst_22 [1] : vector<8x8xf32> to vector<8xf32>
    %40 = vector.shape_cast %39 : vector<8xf32> to vector<8x1xf32>
    %41 = tpu.reciprocal %40 {approx = true} : vector<8x1xf32> -> vector<8x1xf32>
    %42 = vector.broadcast %41 : vector<8x1xf32> to vector<8x8xf32>
    %43 = arith.mulf %38, %42 : vector<8x8xf32>
    %44 = arith.truncf %43 : vector<8x8xf32> to vector<8x8xbf16>
    %c0_23 = arith.constant 0 : index
    %c1 = arith.constant 1 : index
    %c0_24 = arith.constant 0 : index
    %c0_25 = arith.constant 0 : index
    %45 = vector.load %arg9[%c0_23, %c1, %c0_24, %c0_25] : memref<1x8x8x8xbf16, #tpu.memory_space<vmem>>, vector<1x1x8x8xbf16>
    %46 = vector.shape_cast %45 : vector<1x1x8x8xbf16> to vector<8x8xbf16>
    %47 = vector.shape_cast %44 : vector<8x8xbf16> to vector<1x1x8x8xbf16>
    tpu.vector_store %arg9[%c0_23, %c1, %c0_24, %c0_25], %47 {strides = array<i32>} : memref<1x8x8x8xbf16, #tpu.memory_space<vmem>>, vector<1x1x8x8xbf16>,
    %48 = arith.truncf %43 : vector<8x8xf32> to vector<8x8xbf16>
    %cst_26 = arith.constant dense<0.000000e+00> : vector<8x8xf32>
    %49 = tpu.matmul %48, %32, %cst_26 {dimension_numbers = #tpu.dot_dimension_numbers<[1], [0], [0], [1], [0, 0, 1, 1], [], []>} : vector<8x8xbf16>, vector<8x8xbf16>, vector<8x8xf32> -> vector<8x8xf32>
    %50 = arith.truncf %49 : vector<8x8xf32> to vector<8x8xbf16>
    %c0_27 = arith.constant 0 : index
    %c8_28 = arith.constant 8 : index
    %51 = vector.load %arg11[%c0_27, %c8_28] : memref<8x64xbf16, #tpu.memory_space<vmem>>, vector<8x8xbf16>
    tpu.vector_store %arg11[%c0_27, %c8_28], %50 {strides = array<i32>} : memref<8x64xbf16, #tpu.memory_space<vmem>>, vector<8x8xbf16>,
    %52 = vector.extract_strided_slice %7 {offsets = [0, 16], sizes = [8, 8], strides = [1, 1]} : vector<8x64xbf16> to vector<8x8xbf16>
    %c0_29 = arith.constant 0 : index
    %c16 = arith.constant 16 : index
    %53 = vector.load %arg10[%c0_29, %c16] : memref<8x128xbf16, #tpu.memory_space<vmem>>, vector<8x8xbf16>
    %c0_30 = arith.constant 0 : index
    %c80 = arith.constant 80 : index
    %54 = vector.load %arg10[%c0_30, %c80] : memref<8x128xbf16, #tpu.memory_space<vmem>>, vector<8x8xbf16>
    %cst_31 = arith.constant dense<0.000000e+00> : vector<8x8xf32>
    %55 = tpu.matmul %52, %53, %cst_31 {dimension_numbers = #tpu.dot_dimension_numbers<[1], [1], [0], [0], [0, 0, 1, 0], [], []>} : vector<8x8xbf16>, vector<8x8xbf16>, vector<8x8xf32> -> vector<8x8xf32>
    %cst_32 = arith.constant dense<0xFF800000> : vector<8xf32>
    %56 = vector.multi_reduction <maximumf>, %55, %cst_32 [1] : vector<8x8xf32> to vector<8xf32>
    %57 = vector.shape_cast %56 : vector<8xf32> to vector<8x1xf32>
    %58 = vector.broadcast %57 : vector<8x1xf32> to vector<8x8xf32>
    %59 = arith.subf %55, %58 : vector<8x8xf32>
    %60 = math.exp %59 : vector<8x8xf32>
    %cst_33 = arith.constant dense<0.000000e+00> : vector<8xf32>
    %61 = vector.multi_reduction <add>, %60, %cst_33 [1] : vector<8x8xf32> to vector<8xf32>
    %62 = vector.shape_cast %61 : vector<8xf32> to vector<8x1xf32>
    %63 = tpu.reciprocal %62 {approx = true} : vector<8x1xf32> -> vector<8x1xf32>
    %64 = vector.broadcast %63 : vector<8x1xf32> to vector<8x8xf32>
    %65 = arith.mulf %60, %64 : vector<8x8xf32>
    %66 = arith.truncf %65 : vector<8x8xf32> to vector<8x8xbf16>
    %c0_34 = arith.constant 0 : index
    %c2 = arith.constant 2 : index
    %c0_35 = arith.constant 0 : index
    %c0_36 = arith.constant 0 : index
    %67 = vector.load %arg9[%c0_34, %c2, %c0_35, %c0_36] : memref<1x8x8x8xbf16, #tpu.memory_space<vmem>>, vector<1x1x8x8xbf16>
    %68 = vector.shape_cast %67 : vector<1x1x8x8xbf16> to vector<8x8xbf16>
    %69 = vector.shape_cast %66 : vector<8x8xbf16> to vector<1x1x8x8xbf16>
    tpu.vector_store %arg9[%c0_34, %c2, %c0_35, %c0_36], %69 {strides = array<i32>} : memref<1x8x8x8xbf16, #tpu.memory_space<vmem>>, vector<1x1x8x8xbf16>,
    %70 = arith.truncf %65 : vector<8x8xf32> to vector<8x8xbf16>
    %cst_37 = arith.constant dense<0.000000e+00> : vector<8x8xf32>
    %71 = tpu.matmul %70, %54, %cst_37 {dimension_numbers = #tpu.dot_dimension_numbers<[1], [0], [0], [1], [0, 0, 1, 1], [], []>} : vector<8x8xbf16>, vector<8x8xbf16>, vector<8x8xf32> -> vector<8x8xf32>
    %72 = arith.truncf %71 : vector<8x8xf32> to vector<8x8xbf16>
    %c0_38 = arith.constant 0 : index
    %c16_39 = arith.constant 16 : index
    %73 = vector.load %arg11[%c0_38, %c16_39] : memref<8x64xbf16, #tpu.memory_space<vmem>>, vector<8x8xbf16>
    tpu.vector_store %arg11[%c0_38, %c16_39], %72 {strides = array<i32>} : memref<8x64xbf16, #tpu.memory_space<vmem>>, vector<8x8xbf16>,
    %74 = vector.extract_strided_slice %7 {offsets = [0, 24], sizes = [8, 8], strides = [1, 1]} : vector<8x64xbf16> to vector<8x8xbf16>
    %c0_40 = arith.constant 0 : index
    %c24 = arith.constant 24 : index
    %75 = vector.load %arg10[%c0_40, %c24] : memref<8x128xbf16, #tpu.memory_space<vmem>>, vector<8x8xbf16>
    %c0_41 = arith.constant 0 : index
    %c88 = arith.constant 88 : index
    %76 = vector.load %arg10[%c0_41, %c88] : memref<8x128xbf16, #tpu.memory_space<vmem>>, vector<8x8xbf16>
    %cst_42 = arith.constant dense<0.000000e+00> : vector<8x8xf32>
    %77 = tpu.matmul %74, %75, %cst_42 {dimension_numbers = #tpu.dot_dimension_numbers<[1], [1], [0], [0], [0, 0, 1, 0], [], []>} : vector<8x8xbf16>, vector<8x8xbf16>, vector<8x8xf32> -> vector<8x8xf32>
    %cst_43 = arith.constant dense<0xFF800000> : vector<8xf32>
    %78 = vector.multi_reduction <maximumf>, %77, %cst_43 [1] : vector<8x8xf32> to vector<8xf32>
    %79 = vector.shape_cast %78 : vector<8xf32> to vector<8x1xf32>
    %80 = vector.broadcast %79 : vector<8x1xf32> to vector<8x8xf32>
    %81 = arith.subf %77, %80 : vector<8x8xf32>
    %82 = math.exp %81 : vector<8x8xf32>
    %cst_44 = arith.constant dense<0.000000e+00> : vector<8xf32>
    %83 = vector.multi_reduction <add>, %82, %cst_44 [1] : vector<8x8xf32> to vector<8xf32>
    %84 = vector.shape_cast %83 : vector<8xf32> to vector<8x1xf32>
    %85 = tpu.reciprocal %84 {approx = true} : vector<8x1xf32> -> vector<8x1xf32>
    %86 = vector.broadcast %85 : vector<8x1xf32> to vector<8x8xf32>
    %87 = arith.mulf %82, %86 : vector<8x8xf32>
    %88 = arith.truncf %87 : vector<8x8xf32> to vector<8x8xbf16>
    %c0_45 = arith.constant 0 : index
    %c3 = arith.constant 3 : index
    %c0_46 = arith.constant 0 : index
    %c0_47 = arith.constant 0 : index
    %89 = vector.load %arg9[%c0_45, %c3, %c0_46, %c0_47] : memref<1x8x8x8xbf16, #tpu.memory_space<vmem>>, vector<1x1x8x8xbf16>
    %90 = vector.shape_cast %89 : vector<1x1x8x8xbf16> to vector<8x8xbf16>
    %91 = vector.shape_cast %88 : vector<8x8xbf16> to vector<1x1x8x8xbf16>
    tpu.vector_store %arg9[%c0_45, %c3, %c0_46, %c0_47], %91 {strides = array<i32>} : memref<1x8x8x8xbf16, #tpu.memory_space<vmem>>, vector<1x1x8x8xbf16>,
    %92 = arith.truncf %87 : vector<8x8xf32> to vector<8x8xbf16>
    %cst_48 = arith.constant dense<0.000000e+00> : vector<8x8xf32>
    %93 = tpu.matmul %92, %76, %cst_48 {dimension_numbers = #tpu.dot_dimension_numbers<[1], [0], [0], [1], [0, 0, 1, 1], [], []>} : vector<8x8xbf16>, vector<8x8xbf16>, vector<8x8xf32> -> vector<8x8xf32>
    %94 = arith.truncf %93 : vector<8x8xf32> to vector<8x8xbf16>
    %c0_49 = arith.constant 0 : index
    %c24_50 = arith.constant 24 : index
    %95 = vector.load %arg11[%c0_49, %c24_50] : memref<8x64xbf16, #tpu.memory_space<vmem>>, vector<8x8xbf16>
    tpu.vector_store %arg11[%c0_49, %c24_50], %94 {strides = array<i32>} : memref<8x64xbf16, #tpu.memory_space<vmem>>, vector<8x8xbf16>,
    %96 = vector.extract_strided_slice %7 {offsets = [0, 32], sizes = [8, 8], strides = [1, 1]} : vector<8x64xbf16> to vector<8x8xbf16>
    %c0_51 = arith.constant 0 : index
    %c32 = arith.constant 32 : index
    %97 = vector.load %arg10[%c0_51, %c32] : memref<8x128xbf16, #tpu.memory_space<vmem>>, vector<8x8xbf16>
    %c0_52 = arith.constant 0 : index
    %c96 = arith.constant 96 : index
    %98 = vector.load %arg10[%c0_52, %c96] : memref<8x128xbf16, #tpu.memory_space<vmem>>, vector<8x8xbf16>
    %cst_53 = arith.constant dense<0.000000e+00> : vector<8x8xf32>
    %99 = tpu.matmul %96, %97, %cst_53 {dimension_numbers = #tpu.dot_dimension_numbers<[1], [1], [0], [0], [0, 0, 1, 0], [], []>} : vector<8x8xbf16>, vector<8x8xbf16>, vector<8x8xf32> -> vector<8x8xf32>
    %cst_54 = arith.constant dense<0xFF800000> : vector<8xf32>
    %100 = vector.multi_reduction <maximumf>, %99, %cst_54 [1] : vector<8x8xf32> to vector<8xf32>
    %101 = vector.shape_cast %100 : vector<8xf32> to vector<8x1xf32>
    %102 = vector.broadcast %101 : vector<8x1xf32> to vector<8x8xf32>
    %103 = arith.subf %99, %102 : vector<8x8xf32>
    %104 = math.exp %103 : vector<8x8xf32>
    %cst_55 = arith.constant dense<0.000000e+00> : vector<8xf32>
    %105 = vector.multi_reduction <add>, %104, %cst_55 [1] : vector<8x8xf32> to vector<8xf32>
    %106 = vector.shape_cast %105 : vector<8xf32> to vector<8x1xf32>
    %107 = tpu.reciprocal %106 {approx = true} : vector<8x1xf32> -> vector<8x1xf32>
    %108 = vector.broadcast %107 : vector<8x1xf32> to vector<8x8xf32>
    %109 = arith.mulf %104, %108 : vector<8x8xf32>
    %110 = arith.truncf %109 : vector<8x8xf32> to vector<8x8xbf16>
    %c0_56 = arith.constant 0 : index
    %c4 = arith.constant 4 : index
    %c0_57 = arith.constant 0 : index
    %c0_58 = arith.constant 0 : index
    %111 = vector.load %arg9[%c0_56, %c4, %c0_57, %c0_58] : memref<1x8x8x8xbf16, #tpu.memory_space<vmem>>, vector<1x1x8x8xbf16>
    %112 = vector.shape_cast %111 : vector<1x1x8x8xbf16> to vector<8x8xbf16>
    %113 = vector.shape_cast %110 : vector<8x8xbf16> to vector<1x1x8x8xbf16>
    tpu.vector_store %arg9[%c0_56, %c4, %c0_57, %c0_58], %113 {strides = array<i32>} : memref<1x8x8x8xbf16, #tpu.memory_space<vmem>>, vector<1x1x8x8xbf16>,
    %114 = arith.truncf %109 : vector<8x8xf32> to vector<8x8xbf16>
    %cst_59 = arith.constant dense<0.000000e+00> : vector<8x8xf32>
    %115 = tpu.matmul %114, %98, %cst_59 {dimension_numbers = #tpu.dot_dimension_numbers<[1], [0], [0], [1], [0, 0, 1, 1], [], []>} : vector<8x8xbf16>, vector<8x8xbf16>, vector<8x8xf32> -> vector<8x8xf32>
    %116 = arith.truncf %115 : vector<8x8xf32> to vector<8x8xbf16>
    %c0_60 = arith.constant 0 : index
    %c32_61 = arith.constant 32 : index
    %117 = vector.load %arg11[%c0_60, %c32_61] : memref<8x64xbf16, #tpu.memory_space<vmem>>, vector<8x8xbf16>
    tpu.vector_store %arg11[%c0_60, %c32_61], %116 {strides = array<i32>} : memref<8x64xbf16, #tpu.memory_space<vmem>>, vector<8x8xbf16>,
    %118 = vector.extract_strided_slice %7 {offsets = [0, 40], sizes = [8, 8], strides = [1, 1]} : vector<8x64xbf16> to vector<8x8xbf16>
    %c0_62 = arith.constant 0 : index
    %c40 = arith.constant 40 : index
    %119 = vector.load %arg10[%c0_62, %c40] : memref<8x128xbf16, #tpu.memory_space<vmem>>, vector<8x8xbf16>
    %c0_63 = arith.constant 0 : index
    %c104 = arith.constant 104 : index
    %120 = vector.load %arg10[%c0_63, %c104] : memref<8x128xbf16, #tpu.memory_space<vmem>>, vector<8x8xbf16>
    %cst_64 = arith.constant dense<0.000000e+00> : vector<8x8xf32>
    %121 = tpu.matmul %118, %119, %cst_64 {dimension_numbers = #tpu.dot_dimension_numbers<[1], [1], [0], [0], [0, 0, 1, 0], [], []>} : vector<8x8xbf16>, vector<8x8xbf16>, vector<8x8xf32> -> vector<8x8xf32>
    %cst_65 = arith.constant dense<0xFF800000> : vector<8xf32>
    %122 = vector.multi_reduction <maximumf>, %121, %cst_65 [1] : vector<8x8xf32> to vector<8xf32>
    %123 = vector.shape_cast %122 : vector<8xf32> to vector<8x1xf32>
    %124 = vector.broadcast %123 : vector<8x1xf32> to vector<8x8xf32>
    %125 = arith.subf %121, %124 : vector<8x8xf32>
    %126 = math.exp %125 : vector<8x8xf32>
    %cst_66 = arith.constant dense<0.000000e+00> : vector<8xf32>
    %127 = vector.multi_reduction <add>, %126, %cst_66 [1] : vector<8x8xf32> to vector<8xf32>
    %128 = vector.shape_cast %127 : vector<8xf32> to vector<8x1xf32>
    %129 = tpu.reciprocal %128 {approx = true} : vector<8x1xf32> -> vector<8x1xf32>
    %130 = vector.broadcast %129 : vector<8x1xf32> to vector<8x8xf32>
    %131 = arith.mulf %126, %130 : vector<8x8xf32>
    %132 = arith.truncf %131 : vector<8x8xf32> to vector<8x8xbf16>
    %c0_67 = arith.constant 0 : index
    %c5 = arith.constant 5 : index
    %c0_68 = arith.constant 0 : index
    %c0_69 = arith.constant 0 : index
    %133 = vector.load %arg9[%c0_67, %c5, %c0_68, %c0_69] : memref<1x8x8x8xbf16, #tpu.memory_space<vmem>>, vector<1x1x8x8xbf16>
    %134 = vector.shape_cast %133 : vector<1x1x8x8xbf16> to vector<8x8xbf16>
    %135 = vector.shape_cast %132 : vector<8x8xbf16> to vector<1x1x8x8xbf16>
    tpu.vector_store %arg9[%c0_67, %c5, %c0_68, %c0_69], %135 {strides = array<i32>} : memref<1x8x8x8xbf16, #tpu.memory_space<vmem>>, vector<1x1x8x8xbf16>,
    %136 = arith.truncf %131 : vector<8x8xf32> to vector<8x8xbf16>
    %cst_70 = arith.constant dense<0.000000e+00> : vector<8x8xf32>
    %137 = tpu.matmul %136, %120, %cst_70 {dimension_numbers = #tpu.dot_dimension_numbers<[1], [0], [0], [1], [0, 0, 1, 1], [], []>} : vector<8x8xbf16>, vector<8x8xbf16>, vector<8x8xf32> -> vector<8x8xf32>
    %138 = arith.truncf %137 : vector<8x8xf32> to vector<8x8xbf16>
    %c0_71 = arith.constant 0 : index
    %c40_72 = arith.constant 40 : index
    %139 = vector.load %arg11[%c0_71, %c40_72] : memref<8x64xbf16, #tpu.memory_space<vmem>>, vector<8x8xbf16>
    tpu.vector_store %arg11[%c0_71, %c40_72], %138 {strides = array<i32>} : memref<8x64xbf16, #tpu.memory_space<vmem>>, vector<8x8xbf16>,
    %140 = vector.extract_strided_slice %7 {offsets = [0, 48], sizes = [8, 8], strides = [1, 1]} : vector<8x64xbf16> to vector<8x8xbf16>
    %c0_73 = arith.constant 0 : index
    %c48 = arith.constant 48 : index
    %141 = vector.load %arg10[%c0_73, %c48] : memref<8x128xbf16, #tpu.memory_space<vmem>>, vector<8x8xbf16>
    %c0_74 = arith.constant 0 : index
    %c112 = arith.constant 112 : index
    %142 = vector.load %arg10[%c0_74, %c112] : memref<8x128xbf16, #tpu.memory_space<vmem>>, vector<8x8xbf16>
    %cst_75 = arith.constant dense<0.000000e+00> : vector<8x8xf32>
    %143 = tpu.matmul %140, %141, %cst_75 {dimension_numbers = #tpu.dot_dimension_numbers<[1], [1], [0], [0], [0, 0, 1, 0], [], []>} : vector<8x8xbf16>, vector<8x8xbf16>, vector<8x8xf32> -> vector<8x8xf32>
    %cst_76 = arith.constant dense<0xFF800000> : vector<8xf32>
    %144 = vector.multi_reduction <maximumf>, %143, %cst_76 [1] : vector<8x8xf32> to vector<8xf32>
    %145 = vector.shape_cast %144 : vector<8xf32> to vector<8x1xf32>
    %146 = vector.broadcast %145 : vector<8x1xf32> to vector<8x8xf32>
    %147 = arith.subf %143, %146 : vector<8x8xf32>
    %148 = math.exp %147 : vector<8x8xf32>
    %cst_77 = arith.constant dense<0.000000e+00> : vector<8xf32>
    %149 = vector.multi_reduction <add>, %148, %cst_77 [1] : vector<8x8xf32> to vector<8xf32>
    %150 = vector.shape_cast %149 : vector<8xf32> to vector<8x1xf32>
    %151 = tpu.reciprocal %150 {approx = true} : vector<8x1xf32> -> vector<8x1xf32>
    %152 = vector.broadcast %151 : vector<8x1xf32> to vector<8x8xf32>
    %153 = arith.mulf %148, %152 : vector<8x8xf32>
    %154 = arith.truncf %153 : vector<8x8xf32> to vector<8x8xbf16>
    %c0_78 = arith.constant 0 : index
    %c6 = arith.constant 6 : index
    %c0_79 = arith.constant 0 : index
    %c0_80 = arith.constant 0 : index
    %155 = vector.load %arg9[%c0_78, %c6, %c0_79, %c0_80] : memref<1x8x8x8xbf16, #tpu.memory_space<vmem>>, vector<1x1x8x8xbf16>
    %156 = vector.shape_cast %155 : vector<1x1x8x8xbf16> to vector<8x8xbf16>
    %157 = vector.shape_cast %154 : vector<8x8xbf16> to vector<1x1x8x8xbf16>
    tpu.vector_store %arg9[%c0_78, %c6, %c0_79, %c0_80], %157 {strides = array<i32>} : memref<1x8x8x8xbf16, #tpu.memory_space<vmem>>, vector<1x1x8x8xbf16>,
    %158 = arith.truncf %153 : vector<8x8xf32> to vector<8x8xbf16>
    %cst_81 = arith.constant dense<0.000000e+00> : vector<8x8xf32>
    %159 = tpu.matmul %158, %142, %cst_81 {dimension_numbers = #tpu.dot_dimension_numbers<[1], [0], [0], [1], [0, 0, 1, 1], [], []>} : vector<8x8xbf16>, vector<8x8xbf16>, vector<8x8xf32> -> vector<8x8xf32>
    %160 = arith.truncf %159 : vector<8x8xf32> to vector<8x8xbf16>
    %c0_82 = arith.constant 0 : index
    %c48_83 = arith.constant 48 : index
    %161 = vector.load %arg11[%c0_82, %c48_83] : memref<8x64xbf16, #tpu.memory_space<vmem>>, vector<8x8xbf16>
    tpu.vector_store %arg11[%c0_82, %c48_83], %160 {strides = array<i32>} : memref<8x64xbf16, #tpu.memory_space<vmem>>, vector<8x8xbf16>,
    %162 = vector.extract_strided_slice %7 {offsets = [0, 56], sizes = [8, 8], strides = [1, 1]} : vector<8x64xbf16> to vector<8x8xbf16>
    %c0_84 = arith.constant 0 : index
    %c56 = arith.constant 56 : index
    %163 = vector.load %arg10[%c0_84, %c56] : memref<8x128xbf16, #tpu.memory_space<vmem>>, vector<8x8xbf16>
    %c0_85 = arith.constant 0 : index
    %c120 = arith.constant 120 : index
    %164 = vector.load %arg10[%c0_85, %c120] : memref<8x128xbf16, #tpu.memory_space<vmem>>, vector<8x8xbf16>
    %cst_86 = arith.constant dense<0.000000e+00> : vector<8x8xf32>
    %165 = tpu.matmul %162, %163, %cst_86 {dimension_numbers = #tpu.dot_dimension_numbers<[1], [1], [0], [0], [0, 0, 1, 0], [], []>} : vector<8x8xbf16>, vector<8x8xbf16>, vector<8x8xf32> -> vector<8x8xf32>
    %cst_87 = arith.constant dense<0xFF800000> : vector<8xf32>
    %166 = vector.multi_reduction <maximumf>, %165, %cst_87 [1] : vector<8x8xf32> to vector<8xf32>
    %167 = vector.shape_cast %166 : vector<8xf32> to vector<8x1xf32>
    %168 = vector.broadcast %167 : vector<8x1xf32> to vector<8x8xf32>
    %169 = arith.subf %165, %168 : vector<8x8xf32>
    %170 = math.exp %169 : vector<8x8xf32>
    %cst_88 = arith.constant dense<0.000000e+00> : vector<8xf32>
    %171 = vector.multi_reduction <add>, %170, %cst_88 [1] : vector<8x8xf32> to vector<8xf32>
    %172 = vector.shape_cast %171 : vector<8xf32> to vector<8x1xf32>
    %173 = tpu.reciprocal %172 {approx = true} : vector<8x1xf32> -> vector<8x1xf32>
    %174 = vector.broadcast %173 : vector<8x1xf32> to vector<8x8xf32>
    %175 = arith.mulf %170, %174 : vector<8x8xf32>
    %176 = arith.truncf %175 : vector<8x8xf32> to vector<8x8xbf16>
    %c0_89 = arith.constant 0 : index
    %c7 = arith.constant 7 : index
    %c0_90 = arith.constant 0 : index
    %c0_91 = arith.constant 0 : index
    %177 = vector.load %arg9[%c0_89, %c7, %c0_90, %c0_91] : memref<1x8x8x8xbf16, #tpu.memory_space<vmem>>, vector<1x1x8x8xbf16>
    %178 = vector.shape_cast %177 : vector<1x1x8x8xbf16> to vector<8x8xbf16>
    %179 = vector.shape_cast %176 : vector<8x8xbf16> to vector<1x1x8x8xbf16>
    tpu.vector_store %arg9[%c0_89, %c7, %c0_90, %c0_91], %179 {strides = array<i32>} : memref<1x8x8x8xbf16, #tpu.memory_space<vmem>>, vector<1x1x8x8xbf16>,
    %180 = arith.truncf %175 : vector<8x8xf32> to vector<8x8xbf16>
    %cst_92 = arith.constant dense<0.000000e+00> : vector<8x8xf32>
    %181 = tpu.matmul %180, %164, %cst_92 {dimension_numbers = #tpu.dot_dimension_numbers<[1], [0], [0], [1], [0, 0, 1, 1], [], []>} : vector<8x8xbf16>, vector<8x8xbf16>, vector<8x8xf32> -> vector<8x8xf32>
    %182 = arith.truncf %181 : vector<8x8xf32> to vector<8x8xbf16>
    %c0_93 = arith.constant 0 : index
    %c56_94 = arith.constant 56 : index
    %183 = vector.load %arg11[%c0_93, %c56_94] : memref<8x64xbf16, #tpu.memory_space<vmem>>, vector<8x8xbf16>
    tpu.vector_store %arg11[%c0_93, %c56_94], %182 {strides = array<i32>} : memref<8x64xbf16, #tpu.memory_space<vmem>>, vector<8x8xbf16>,
    %c0_95 = arith.constant 0 : index
    %c0_96 = arith.constant 0 : index
    %184 = vector.load %arg11[%c0_95, %c0_96] : memref<8x64xbf16, #tpu.memory_space<vmem>>, vector<8x64xbf16>
    %c0_97 = arith.constant 0 : index
    %c0_98 = arith.constant 0 : index
    %185 = vector.load %arg6[%c0_97, %c0_98] : memref<64x64xbf16, #tpu.memory_space<vmem>>, vector<64x64xbf16>
    %cst_99 = arith.constant dense<0.000000e+00> : vector<8x64xf32>
    %186 = tpu.matmul %184, %185, %cst_99 {dimension_numbers = #tpu.dot_dimension_numbers<[1], [0], [0], [1], [0, 0, 1, 1], [], []>} : vector<8x64xbf16>, vector<64x64xbf16>, vector<8x64xf32> -> vector<8x64xf32>
    %c0_100 = arith.constant 0 : index
    %c0_101 = arith.constant 0 : index
    %187 = vector.load %arg7[%c0_100, %c0_101] : memref<1x64xf32, #tpu.memory_space<vmem>>, vector<1x64xf32>
    %188 = vector.broadcast %187 : vector<1x64xf32> to vector<8x64xf32>
    %189 = arith.addf %186, %188 : vector<8x64xf32>
    %c0_102 = arith.constant 0 : index
    %c0_103 = arith.constant 0 : index
    %c0_104 = arith.constant 0 : index
    %190 = vector.load %arg8[%c0_102, %c0_103, %c0_104] : memref<1x8x64xf32, #tpu.memory_space<vmem>>, vector<1x8x64xf32>
    %191 = vector.shape_cast %190 : vector<1x8x64xf32> to vector<8x64xf32>
    %192 = vector.shape_cast %189 : vector<8x64xf32> to vector<1x8x64xf32>
    tpu.vector_store %arg8[%c0_102, %c0_103, %c0_104], %192 {strides = array<i32>} : memref<1x8x64xf32, #tpu.memory_space<vmem>>, vector<1x8x64xf32>,
    return
  }
  func.func @transform_0(%arg0: i32, %arg1: i32) -> (i32, i32, i32) {
    %c0_i32 = arith.constant 0 : i32
    %c0_i32_0 = arith.constant 0 : i32
    return %arg0, %arg1, %c0_i32 : i32, i32, i32
  }
  func.func @transform_1(%arg0: i32, %arg1: i32) -> (i32, i32, i32) {
    %c0_i32 = arith.constant 0 : i32
    %c0_i32_0 = arith.constant 0 : i32
    %c0_i32_1 = arith.constant 0 : i32
    return %arg0, %c0_i32, %c0_i32_0 : i32, i32, i32
  }
  func.func @transform_2(%arg0: i32, %arg1: i32) -> (i32, i32) {
    %c0_i32 = arith.constant 0 : i32
    %c0_i32_0 = arith.constant 0 : i32
    %c0_i32_1 = arith.constant 0 : i32
    return %c0_i32, %c0_i32_0 : i32, i32
  }
  func.func @transform_3(%arg0: i32, %arg1: i32) -> (i32, i32) {
    %c0_i32 = arith.constant 0 : i32
    %c0_i32_0 = arith.constant 0 : i32
    %c0_i32_1 = arith.constant 0 : i32
    return %c0_i32, %c0_i32_0 : i32, i32
  }
  func.func @transform_4(%arg0: i32, %arg1: i32) -> (i32, i32) {
    %c0_i32 = arith.constant 0 : i32
    %c0_i32_0 = arith.constant 0 : i32
    %c0_i32_1 = arith.constant 0 : i32
    return %c0_i32, %c0_i32_0 : i32, i32
  }
  func.func @transform_5(%arg0: i32, %arg1: i32) -> (i32, i32) {
    %c0_i32 = arith.constant 0 : i32
    %c0_i32_0 = arith.constant 0 : i32
    %c0_i32_1 = arith.constant 0 : i32
    return %c0_i32, %c0_i32_0 : i32, i32
  }
  func.func @transform_6(%arg0: i32, %arg1: i32) -> (i32, i32, i32) {
    %c0_i32 = arith.constant 0 : i32
    %c0_i32_0 = arith.constant 0 : i32
    return %arg0, %arg1, %c0_i32 : i32, i32, i32
  }
  func.func @transform_7(%arg0: i32, %arg1: i32) -> (i32, i32, i32, i32) {
    %c0_i32 = arith.constant 0 : i32
    %c0_i32_0 = arith.constant 0 : i32
    %c0_i32_1 = arith.constant 0 : i32
    return %arg0, %c0_i32, %arg1, %c0_i32_0 : i32, i32, i32, i32
  }
}

</mosaic_0001>

<llo_original>
// kernel: tpu_custom_call.1
$region0: #{tpu_custom_call.1}
  #allocation0 [shape = 'u32[]', space=smem, size = 0x4, offset = 0x4, fixed_abs, tag = 'smem constant byte address 0x4 - core index']
  #allocation1 [shape = 'u32[144,128]{1,0:T(1,128)}', space=vmem, size = 0x12000, scoped, tag = 'internal scratch']
  #allocation2 [shape = 'bf16[8,128]{1,0:T(8,128)(2,1)}', space=vmem, size = 0x800, scoped, tag = 'scratch operand']
  #allocation3 [shape = 'bf16[8,64]{1,0:T(8,128)(2,1)}', space=vmem, size = 0x800, scoped, tag = 'scratch operand']
  %s0 = inlined_call_operand.hbm [shape: bf16[2,8,64], index: 0, kind: input, shape index: {}]
  %s1 = inlined_call_operand.hbm [shape: bf16[2,8,64], index: 1, kind: input, shape index: {}]
  %s2 = inlined_call_operand.hbm [shape: bf16[64,64], index: 2, kind: input, shape index: {}]
  %s3 = inlined_call_operand.hbm [shape: bf16[64,128], index: 3, kind: input, shape index: {}]
  %s4 = inlined_call_operand.hbm [shape: bf16[64,64], index: 4, kind: input, shape index: {}]
  %s5 = inlined_call_operand.vmem [shape: f32[1,64], index: 5, kind: input, shape index: {}]
  %s6 = inlined_call_operand.hbm [shape: f32[2,8,64], index: 6, kind: output, shape index: {0}]
  %s7 = inlined_call_operand.hbm [shape: bf16[2,8,8,8], index: 7, kind: output, shape index: {1}]
  %8 = xla_tuple %s6, %s7
  %s9 = sld [smem:[#allocation0]]
  $region89: #{tpu_custom_call.1} parent=0
    _
  %s11 = ssub.s32 1, %s9
  %s12 = scalar_select 0, %s11, %s9
  $region1: #{tpu_custom_call.1} parent=0
    #allocation4 [shape = 'u8[4096]{0}', space=vmem, size = 0x1000, scoped, tag = 'input window, operand 0']
    #allocation5 [shape = 's32[2]{0}', space=sflag, size = 0x8, scoped, tag = 'scoped memory for tpu_custom_call.1']
    #allocation6 [shape = 's32[2]{0}', space=sflag, size = 0x8, scoped, tag = 'scoped memory for tpu_custom_call.1']
    #allocation7 [shape = 'u8[4096]{0}', space=vmem, size = 0x1000, scoped, tag = 'input window, operand 1']
    #allocation8 [shape = 's32[2]{0}', space=sflag, size = 0x8, scoped, tag = 'scoped memory for tpu_custom_call.1']
    #allocation9 [shape = 'u8[16384]{0}', space=vmem, size = 0x4000, scoped, tag = 'input window, operand 2, single buffered']
    #allocation10 [shape = 'u8[16384]{0}', space=vmem, size = 0x4000, scoped, tag = 'input window, operand 3, single buffered']
    #allocation11 [shape = 's32[1]{0}', space=sflag, size = 0x4, scoped, tag = 'scoped memory for tpu_custom_call.1']
    #allocation12 [shape = 'u8[16384]{0}', space=vmem, size = 0x4000, scoped, tag = 'input window, operand 4, single buffered']
    #allocation13 [shape = 'u8[8192]{0}', space=vmem, size = 0x2000, scoped, tag = 'output window, operand 0']
    #allocation14 [shape = 'u8[32768]{0}', space=vmem, size = 0x8000, scoped, tag = 'output window, operand 1']
    #allocation15 [shape = 's32[2]{0}', space=sflag, size = 0x8, scoped, tag = 'scoped memory for tpu_custom_call.1']
    %13 = vsyncpa [#allocation5], 0
    %s14 = scalar_lea.sflag [#allocation5], 1
    %15 = vsyncpa %s14, 0
    %16 = vsyncpa [#allocation8], 0
    %s17 = scalar_lea.sflag [#allocation8], 1
    %18 = vsyncpa %s17, 0
    %19 = vsyncpa [#allocation11], 0
    %20 = vsyncpa [#allocation6], 0
    %s21 = scalar_lea.sflag [#allocation6], 1
    %22 = vsyncpa %s21, 0
    %23 = vsyncpa [#allocation15], 0
    %s24 = scalar_lea.sflag [#allocation15], 1
    %25 = vsyncpa %s24, 0
    loop: start=0, step=1, limit=4
    $region2: #{tpu_custom_call.1} parent=1 // loop_pre_header
      _
    $region3: #{tpu_custom_call.1} parent=1 // loop_header
      %s27 = sphi 0, %s31
      %p28 = scmp.ge.s32.totalorder %s27, 4
      %s34 = sphi 0, %s46
      %s35 = sphi 0, %s42
      %s36 = sphi 0, %s34
      %s37 = sphi 0, %s35
      %s38 = sphi 0, %s36
      %s39 = sphi 0, %s37
      %s51 = sphi 0, %s53
      %s54 = sphi 0, %s51
      %s55 = sphi 0, %s54
      %s71 = sphi 0, %s55
      %s77 = sphi 0, %s79
      %s80 = sphi 0, %s77
      %s81 = sphi 0, %s80
      %s97 = sphi 0, %s81
      %s101 = sphi 0, %s101
      %s103 = sphi 0, %s101
      %s104 = sphi 0, %s103
      %s118 = sphi 0, %s104
      %s122 = sphi 0, %s122
      %s124 = sphi 0, %s122
      %s125 = sphi 0, %s124
      %s139 = sphi 0, %s125
      %s143 = sphi 0, %s143
      %s145 = sphi 0, %s143
      %s146 = sphi 0, %s145
      %s160 = sphi 0, %s146
      %s164 = sphi 0, %s164
      %s166 = sphi 0, %s164
      %s167 = sphi 0, %s166
      %s181 = sphi 0, %s167
      %s189 = sphi 0, %s191
      %s192 = sphi 0, %s189
      %s193 = sphi 0, %s192
      %s209 = sphi 0, %s193
      %s217 = sphi 0, %s219
      %s220 = sphi 0, %s217
      %s221 = sphi 0, %s220
      %s237 = sphi 0, %s221
    $region4: #{tpu_custom_call.1} parent=1 // loop_header_branch
      %30 = sbr.rel (%p28) target = $region8
    $region5: #{tpu_custom_call.1} parent=1 // loop_body
      %s32 = ssub.s32 %s27, 1
      %s33 = ssub.s32 %s27, 2
      %s40 = sadd.s32 1, %s35
      %p41 = scmp.ge.s32.totalorder %s40, 1
      %s42 = scalar_select %p41, 0, %s40
      %s43 = sadd.s32 1, %s34
      %s44 = scalar_select %p41, %s43, %s34
      %p45 = scmp.ge.s32.totalorder %s44, 2
      %s46 = scalar_select %p45, 0, %s44
      %s47 = ssub.s32 %s34, %s46
      %s48 = ssub.s32 %s35, %s42
      %s49 = sor.u32 %s47, %s48
      %p50 = scmp.eq.s32.totalorder %s49, 0
      %s52 = sadd.s32 %s51, 1
      %s53 = scalar_select %p50, %s51, %s52
      %p56 = pneg %p50
      %p57 = scmp.eq.s32.totalorder %s27, 1
      %p58 = por %p56, %p57
      %p59 = scmp.ne.s32.totalorder %s51, %s54
      %p60 = scmp.eq.s32.totalorder %s27, 0
      %p61 = por %p59, %p60
      %p62 = scmp.ne.s32.totalorder %s51, %s54
      %p63 = scmp.eq.s32.totalorder %s32, 1
      %p64 = por %p62, %p63
      %p65 = scmp.ne.s32.totalorder %s54, %s55
      %p66 = scmp.eq.s32.totalorder %s32, 0
      %p67 = por %p65, %p66
      %p68 = scmp.ne.s32.totalorder %s54, %s55
      %p69 = scmp.eq.s32.totalorder %s33, 1
      %p70 = por %p68, %p69
      %p72 = scmp.ne.s32.totalorder %s55, %s71
      %p73 = scmp.eq.s32.totalorder %s33, 0
      %p74 = por %p72, %p73
      %s75 = ssub.s32 %s34, %s46
      %p76 = scmp.eq.s32.totalorder %s75, 0
      %s78 = sadd.s32 %s77, 1
      %s79 = scalar_select %p76, %s77, %s78
      %p82 = pneg %p76
      %p83 = scmp.eq.s32.totalorder %s27, 1
      %p84 = por %p82, %p83
      %p85 = scmp.ne.s32.totalorder %s77, %s80
      %p86 = scmp.eq.s32.totalorder %s27, 0
      %p87 = por %p85, %p86
      %p88 = scmp.ne.s32.totalorder %s77, %s80
      %p89 = scmp.eq.s32.totalorder %s32, 1
      %p90 = por %p88, %p89
      %p91 = scmp.ne.s32.totalorder %s80, %s81
      %p92 = scmp.eq.s32.totalorder %s32, 0
      %p93 = por %p91, %p92
      %p94 = scmp.ne.s32.totalorder %s80, %s81
      %p95 = scmp.eq.s32.totalorder %s33, 1
      %p96 = por %p94, %p95
      %p98 = scmp.ne.s32.totalorder %s81, %s97
      %p99 = scmp.eq.s32.totalorder %s33, 0
      %p100 = por %p98, %p99
      %s102 = sadd.s32 %s101, 1
      %p105 = scmp.eq.s32.totalorder %s27, 1
      %p106 = scmp.ne.s32.totalorder %s101, %s103
      %p107 = scmp.eq.s32.totalorder %s27, 0
      %p108 = por %p106, %p107
      %p109 = scmp.ne.s32.totalorder %s101, %s103
      %p110 = scmp.eq.s32.totalorder %s32, 1
      %p111 = por %p109, %p110
      %p112 = scmp.ne.s32.totalorder %s103, %s104
      %p113 = scmp.eq.s32.totalorder %s32, 0
      %p114 = por %p112, %p113
      %p115 = scmp.ne.s32.totalorder %s103, %s104
      %p116 = scmp.eq.s32.totalorder %s33, 1
      %p117 = por %p115, %p116
      %p119 = scmp.ne.s32.totalorder %s104, %s118
      %p120 = scmp.eq.s32.totalorder %s33, 0
      %p121 = por %p119, %p120
      %s123 = sadd.s32 %s122, 1
      %p126 = scmp.eq.s32.totalorder %s27, 1
      %p127 = scmp.ne.s32.totalorder %s122, %s124
      %p128 = scmp.eq.s32.totalorder %s27, 0
      %p129 = por %p127, %p128
      %p130 = scmp.ne.s32.totalorder %s122, %s124
      %p131 = scmp.eq.s32.totalorder %s32, 1
      %p132 = por %p130, %p131
      %p133 = scmp.ne.s32.totalorder %s124, %s125
      %p134 = scmp.eq.s32.totalorder %s32, 0
      %p135 = por %p133, %p134
      %p136 = scmp.ne.s32.totalorder %s124, %s125
      %p137 = scmp.eq.s32.totalorder %s33, 1
      %p138 = por %p136, %p137
      %p140 = scmp.ne.s32.totalorder %s125, %s139
      %p141 = scmp.eq.s32.totalorder %s33, 0
      %p142 = por %p140, %p141
      %s144 = sadd.s32 %s143, 1
      %p147 = scmp.eq.s32.totalorder %s27, 1
      %p148 = scmp.ne.s32.totalorder %s143, %s145
      %p149 = scmp.eq.s32.totalorder %s27, 0
      %p150 = por %p148, %p149
      %p151 = scmp.ne.s32.totalorder %s143, %s145
      %p152 = scmp.eq.s32.totalorder %s32, 1
      %p153 = por %p151, %p152
      %p154 = scmp.ne.s32.totalorder %s145, %s146
      %p155 = scmp.eq.s32.totalorder %s32, 0
      %p156 = por %p154, %p155
      %p157 = scmp.ne.s32.totalorder %s145, %s146
      %p158 = scmp.eq.s32.totalorder %s33, 1
      %p159 = por %p157, %p158
      %p161 = scmp.ne.s32.totalorder %s146, %s160
      %p162 = scmp.eq.s32.totalorder %s33, 0
      %p163 = por %p161, %p162
      %s165 = sadd.s32 %s164, 1
      %p168 = scmp.eq.s32.totalorder %s27, 1
      %p169 = scmp.ne.s32.totalorder %s164, %s166
      %p170 = scmp.eq.s32.totalorder %s27, 0
      %p171 = por %p169, %p170
      %p172 = scmp.ne.s32.totalorder %s164, %s166
      %p173 = scmp.eq.s32.totalorder %s32, 1
      %p174 = por %p172, %p173
      %p175 = scmp.ne.s32.totalorder %s166, %s167
      %p176 = scmp.eq.s32.totalorder %s32, 0
      %p177 = por %p175, %p176
      %p178 = scmp.ne.s32.totalorder %s166, %s167
      %p179 = scmp.eq.s32.totalorder %s33, 1
      %p180 = por %p178, %p179
      %p182 = scmp.ne.s32.totalorder %s167, %s181
      %p183 = scmp.eq.s32.totalorder %s33, 0
      %p184 = por %p182, %p183
      %s185 = ssub.s32 %s34, %s46
      %s186 = ssub.s32 %s35, %s42
      %s187 = sor.u32 %s185, %s186
      %p188 = scmp.eq.s32.totalorder %s187, 0
      %s190 = sadd.s32 %s189, 1
      %s191 = scalar_select %p188, %s189, %s190
      %p194 = pneg %p188
      %p195 = scmp.eq.s32.totalorder %s27, 1
      %p196 = por %p194, %p195
      %p197 = scmp.ne.s32.totalorder %s189, %s192
      %p198 = scmp.eq.s32.totalorder %s27, 0
      %p199 = por %p197, %p198
      %p200 = scmp.ne.s32.totalorder %s189, %s192
      %p201 = scmp.eq.s32.totalorder %s32, 1
      %p202 = por %p200, %p201
      %p203 = scmp.ne.s32.totalorder %s192, %s193
      %p204 = scmp.eq.s32.totalorder %s32, 0
      %p205 = por %p203, %p204
      %p206 = scmp.ne.s32.totalorder %s192, %s193
      %p207 = scmp.eq.s32.totalorder %s33, 1
      %p208 = por %p206, %p207
      %p210 = scmp.ne.s32.totalorder %s193, %s209
      %p211 = scmp.eq.s32.totalorder %s33, 0
      %p212 = por %p210, %p211
      %s213 = ssub.s32 %s34, %s46
      %s214 = ssub.s32 %s35, %s42
      %s215 = sor.u32 %s213, %s214
      %p216 = scmp.eq.s32.totalorder %s215, 0
      %s218 = sadd.s32 %s217, 1
      %s219 = scalar_select %p216, %s217, %s218
      %p222 = pneg %p216
      %p223 = scmp.eq.s32.totalorder %s27, 1
      %p224 = por %p222, %p223
      %p225 = scmp.ne.s32.totalorder %s217, %s220
      %p226 = scmp.eq.s32.totalorder %s27, 0
      %p227 = por %p225, %p226
      %p228 = scmp.ne.s32.totalorder %s217, %s220
      %p229 = scmp.eq.s32.totalorder %s32, 1
      %p230 = por %p228, %p229
      %p231 = scmp.ne.s32.totalorder %s220, %s221
      %p232 = scmp.eq.s32.totalorder %s32, 0
      %p233 = por %p231, %p232
      %p234 = scmp.ne.s32.totalorder %s220, %s221
      %p235 = scmp.eq.s32.totalorder %s33, 1
      %p236 = por %p234, %p235
      %p238 = scmp.ne.s32.totalorder %s221, %s237
      %p239 = scmp.eq.s32.totalorder %s33, 0
      %p240 = por %p238, %p239
      %p241 = scmp.le.s32.totalorder 1, %s27
      %p242 = scmp.lt.s32.totalorder %s27, 3
      %p243 = pnand %p241, %p242
      %p244 = pneg %p243
      // Predicated region
      $region9: #{tpu_custom_call.1} parent=5 // pred_check
        _
      $region10: #{tpu_custom_call.1} parent=5 // pred_check_branch
        %246 = sbr.rel (%p243) target = $region12
      $region11: #{tpu_custom_call.1} parent=5 // pred_region
        %s247 = ssub.s32 %s27, 1
        // Predicated region
        $region13: #{tpu_custom_call.1} parent=11 // pred_check
          %p248 = pneg %p114
        $region14: #{tpu_custom_call.1} parent=11 // pred_check_branch
          %250 = sbr.rel (%p248) target = $region16
        $region15: #{tpu_custom_call.1} parent=11 // pred_region
          %s252 = ssub.s32 512, 512
          %253 = vsyncadd [#allocation8], %s252
          %s254 = sshll.u32 [#allocation9], 4
          %s255 = int_to_ptr.vmem [resolvable:$true] %s254
          %260 = dma.hbm_to_vmem [thread:$0]  %s2, 512, %s255, [#allocation8], 64, 64, 4
        $region16: #{tpu_custom_call.1} parent=11 // pred_fallthru
          _
        // Predicated region
        $region17: #{tpu_custom_call.1} parent=11 // pred_check
          %p261 = pneg %p135
        $region18: #{tpu_custom_call.1} parent=11 // pred_check_branch
          %263 = sbr.rel (%p261) target = $region20
        $region19: #{tpu_custom_call.1} parent=11 // pred_region
          %s265 = ssub.s32 512, 512
          %266 = vsyncadd [#allocation11], %s265
          %s267 = sshll.u32 [#allocation10], 4
          %s268 = int_to_ptr.vmem [resolvable:$true] %s267
          %273 = dma.hbm_to_vmem [thread:$0]  %s3, 512, %s268, [#allocation11], 64, 64, 4
        $region20: #{tpu_custom_call.1} parent=11 // pred_fallthru
          _
        // Predicated region
        $region21: #{tpu_custom_call.1} parent=11 // pred_check
          %p274 = pneg %p156
        $region22: #{tpu_custom_call.1} parent=11 // pred_check_branch
          %276 = sbr.rel (%p274) target = $region24
        $region23: #{tpu_custom_call.1} parent=11 // pred_region
          %s278 = ssub.s32 512, 512
          %279 = vsyncadd [#allocation11], %s278
          %s280 = sshll.u32 [#allocation12], 4
          %s281 = int_to_ptr.vmem [resolvable:$true] %s280
          %286 = dma.hbm_to_vmem [thread:$0]  %s4, 512, %s281, [#allocation11], 64, 64, 4
        $region24: #{tpu_custom_call.1} parent=11 // pred_fallthru
          _
        // Predicated region
        $region25: #{tpu_custom_call.1} parent=11 // pred_check
          %p287 = pneg %p177
        $region26: #{tpu_custom_call.1} parent=11 // pred_check_branch
          %289 = sbr.rel (%p287) target = $region28
        $region27: #{tpu_custom_call.1} parent=11 // pred_region
          _
        $region28: #{tpu_custom_call.1} parent=11 // pred_fallthru
          _
      $region12: #{tpu_custom_call.1} parent=5 // pred_fallthru
        _
      %p290 = scmp.lt.s32.totalorder %s27, 2
      // Predicated region
      $region29: #{tpu_custom_call.1} parent=5 // pred_check
        %p291 = pneg %p290
      $region30: #{tpu_custom_call.1} parent=5 // pred_check_branch
        %293 = sbr.rel (%p291) target = $region32
      $region31: #{tpu_custom_call.1} parent=5 // pred_region
        // Predicated region
        $region33: #{tpu_custom_call.1} parent=31 // pred_check
          %p294 = pneg %p61
        $region34: #{tpu_custom_call.1} parent=31 // pred_check_branch
          %296 = sbr.rel (%p294) target = $region36
        $region35: #{tpu_custom_call.1} parent=31 // pred_region
          %s297 = sand.u32 %s51, 1
          %s298 = scalar_lea.sflag [#allocation5], %s297
          %s299 = sand.u32 %s51, 1
          %s300 = smul.addr %s299, 4
          %s301 = scalar_lea.vmem [#allocation4], %s300
          %s303 = ssub.s32 64, 64
          %304 = vsyncadd %s298, %s303
          %s305 = sadd.s32 %s35, %s34
          %s306 = smul.addr %s305, 64
          %s307 = scalar_lea.hbm %s0, %s306
          %s309 = sshll.u32 %s301, 4
          %s310 = int_to_ptr.vmem [resolvable:$true] %s309
          %312 = dma.hbm_to_vmem [thread:$0]  %s307, 64, %s310, %s298
        $region36: #{tpu_custom_call.1} parent=31 // pred_fallthru
          _
        // Predicated region
        $region37: #{tpu_custom_call.1} parent=31 // pred_check
          %p313 = pneg %p87
        $region38: #{tpu_custom_call.1} parent=31 // pred_check_branch
          %315 = sbr.rel (%p313) target = $region40
        $region39: #{tpu_custom_call.1} parent=31 // pred_region
          %s316 = sand.u32 %s27, 1
          %s317 = scalar_lea.sflag [#allocation8], %s316
          %s318 = sand.u32 %s77, 1
          %s319 = smul.addr %s318, 4
          %s320 = scalar_lea.vmem [#allocation7], %s319
          %s322 = ssub.s32 64, 64
          %323 = vsyncadd %s317, %s322
          %s324 = smul.addr %s34, 64
          %s325 = scalar_lea.hbm %s1, %s324
          %s327 = sshll.u32 %s320, 4
          %s328 = int_to_ptr.vmem [resolvable:$true] %s327
          %330 = dma.hbm_to_vmem [thread:$0]  %s325, 64, %s328, %s317
        $region40: #{tpu_custom_call.1} parent=31 // pred_fallthru
          _
      $region32: #{tpu_custom_call.1} parent=5 // pred_fallthru
        _
      %p331 = scmp.le.s32.totalorder 1, %s27
      %p332 = scmp.lt.s32.totalorder %s27, 3
      %p333 = pnand %p331, %p332
      %p334 = pneg %p333
      // Predicated region
      $region41: #{tpu_custom_call.1} parent=5 // pred_check
        _
      $region42: #{tpu_custom_call.1} parent=5 // pred_check_branch
        %336 = sbr.rel (%p333) target = $region44
      $region43: #{tpu_custom_call.1} parent=5 // pred_region
        %s337 = ssub.s32 %s27, 1
        %s338 = sand.u32 %s54, 1
        %s339 = scalar_lea.sflag [#allocation5], %s338
        %s340 = sand.u32 %s54, 1
        %s341 = smul.addr %s340, 4
        %s342 = scalar_lea.vmem [#allocation4], %s341
        // Predicated region
        $region45: #{tpu_custom_call.1} parent=43 // pred_check
          %p343 = pneg %p67
        $region46: #{tpu_custom_call.1} parent=43 // pred_check_branch
          %345 = sbr.rel (%p343) target = $region48
        $region47: #{tpu_custom_call.1} parent=43 // pred_region
          %346 = dma.done %s339, 64
        $region48: #{tpu_custom_call.1} parent=43 // pred_fallthru
          _
        %s347 = sand.u32 %s32, 1
        %s348 = scalar_lea.sflag [#allocation8], %s347
        %s349 = sand.u32 %s80, 1
        %s350 = smul.addr %s349, 4
        %s351 = scalar_lea.vmem [#allocation7], %s350
        // Predicated region
        $region49: #{tpu_custom_call.1} parent=43 // pred_check
          %p352 = pneg %p93
        $region50: #{tpu_custom_call.1} parent=43 // pred_check_branch
          %354 = sbr.rel (%p352) target = $region52
        $region51: #{tpu_custom_call.1} parent=43 // pred_region
          %355 = dma.done %s348, 64
        $region52: #{tpu_custom_call.1} parent=43 // pred_fallthru
          _
        // Predicated region
        $region53: #{tpu_custom_call.1} parent=43 // pred_check
          %p356 = pneg %p114
        $region54: #{tpu_custom_call.1} parent=43 // pred_check_branch
          %358 = sbr.rel (%p356) target = $region56
        $region55: #{tpu_custom_call.1} parent=43 // pred_region
          %359 = dma.done [#allocation8], 512
        $region56: #{tpu_custom_call.1} parent=43 // pred_fallthru
          _
        // Predicated region
        $region57: #{tpu_custom_call.1} parent=43 // pred_check
          %p360 = pneg %p135
        $region58: #{tpu_custom_call.1} parent=43 // pred_check_branch
          %362 = sbr.rel (%p360) target = $region60
        $region59: #{tpu_custom_call.1} parent=43 // pred_region
          %363 = dma.done [#allocation11], 512
        $region60: #{tpu_custom_call.1} parent=43 // pred_fallthru
          _
        // Predicated region
        $region61: #{tpu_custom_call.1} parent=43 // pred_check
          %p364 = pneg %p156
        $region62: #{tpu_custom_call.1} parent=43 // pred_check_branch
          %366 = sbr.rel (%p364) target = $region64
        $region63: #{tpu_custom_call.1} parent=43 // pred_region
          %367 = dma.done [#allocation11], 512
        $region64: #{tpu_custom_call.1} parent=43 // pred_fallthru
          _
        %s368 = sand.u32 %s54, 1
        %s369 = scalar_lea.sflag [#allocation5], %s368
        %s370 = sand.u32 %s54, 1
        %s371 = smul.addr %s370, 4
        %s372 = scalar_lea.vmem [#allocation4], %s371
        %p373 = pneg %p67
        %p374 = pneg %p64
        %s375 = sand.u32 %s32, 1
        %s376 = scalar_lea.sflag [#allocation8], %s375
        %s377 = sand.u32 %s80, 1
        %s378 = smul.addr %s377, 4
        %s379 = scalar_lea.vmem [#allocation7], %s378
        %p380 = pneg %p93
        %p381 = pneg %p90
        %p382 = pneg %p114
        %p383 = pneg %p111
        %p384 = pneg %p135
        %p385 = pneg %p132
        %p386 = pneg %p156
        %p387 = pneg %p153
        %p388 = pneg %p177
        %p389 = pneg %p174
        %p390 = pneg %p205
        %p391 = pneg %p202
        %s392 = sand.u32 %s192, 1
        %s393 = scalar_lea.sflag [#allocation6], %s392
        %s394 = sand.u32 %s192, 1
        %s395 = smul.addr %s394, 8
        %s396 = scalar_lea.vmem [#allocation13], %s395
        %p397 = pneg %p233
        %p398 = pneg %p230
        %s399 = sand.u32 %s220, 1
        %s400 = scalar_lea.sflag [#allocation15], %s399
        %s401 = sand.u32 %s220, 1
        %s402 = smul.addr %s401, 32
        %s403 = scalar_lea.vmem [#allocation14], %s402
        %p405 = scmp.eq.s32.totalorder %s37, 0
        // Predicated region
        $region65: #{tpu_custom_call.1} parent=43 // pred_check
          %p406 = pneg %p405
        $region66: #{tpu_custom_call.1} parent=43 // pred_check_branch
          %408 = sbr.rel (%p406) target = $region68
        $region67: #{tpu_custom_call.1} parent=43 // pred_region
          %v409 = vld [vmem:[%s351] sm:$0xf]
          %v410 = vld [vmem:[#allocation10] sm:$0xf]
          %v411 = vld [vmem:[#allocation10 + $0x4] sm:$0xf]
          %v412 = vld [vmem:[#allocation10 + $0x8] sm:$0xf]
          %v413 = vld [vmem:[#allocation10 + $0xc] sm:$0xf]
          %v414 = vld [vmem:[#allocation10 + $0x10] sm:$0xf]
          %v415 = vld [vmem:[#allocation10 + $0x14] sm:$0xf]
          %v416 = vld [vmem:[#allocation10 + $0x18] sm:$0xf]
          %v417 = vld [vmem:[#allocation10 + $0x1c] sm:$0xf]
          %v426 = vunpack.c.l.b16 %v410
          %v427 = vunpack.c.l.b16 %v411
          %v428 = vunpack.c.l.b16 %v412
          %v429 = vunpack.c.l.b16 %v413
          %v430 = vunpack.c.l.b16 %v414
          %v431 = vunpack.c.l.b16 %v415
          %v432 = vunpack.c.l.b16 %v416
          %v433 = vunpack.c.l.b16 %v417
          %v434 = vpack.c.b16 %v427, %v426
          %v435 = vpack.c.b16 %v429, %v428
          %v436 = vpack.c.b16 %v431, %v430
          %v437 = vpack.c.b16 %v433, %v432
          %vm442 = vcmask 523264
          %v444 = vsel %vm442, %v409, 0
          %446 = vmatprep.subr.bf16.mxu0 0
          %447 = vmatpush1.bf16.msra.mxu0 %v434
          %448 = vmatprep.subr.bf16.mxu0 0
          %449 = vmatpush1.bf16.msra.mxu0 %v435
          %450 = vmatprep.subr.bf16.mxu0 0
          %451 = vmatpush1.bf16.msra.mxu0 %v436
          %452 = vmatprep.subr.bf16.mxu0 0
          %453 = vmatpush1.bf16.msra.mxu0 %v437
          %454 = vmatprep.subr.bf16.mxu0 0
          %455 = vmatpush1.bf16.msra.mxu0 0
          %456 = vmatprep.subr.bf16.mxu0 0
          %457 = vmatpush1.bf16.msra.mxu0 0
          %458 = vmatprep.subr.bf16.mxu0 0
          %459 = vmatpush1.bf16.msra.mxu0 0
          %460 = vmatprep.subr.bf16.mxu0 0
          %461 = vmatpush1.bf16.msra.mxu0 0
          %462 = vmatprep.subr.bf16.mxu0 0
          %463 = vmatpush1.bf16.msra.mxu0 0
          %464 = vmatprep.subr.bf16.mxu0 0
          %465 = vmatpush1.bf16.msra.mxu0 0
          %466 = vmatprep.subr.bf16.mxu0 0
          %467 = vmatpush1.bf16.msra.mxu0 0
          %468 = vmatprep.subr.bf16.mxu0 0
          %469 = vmatpush1.bf16.msra.mxu0 0
          %470 = vmatprep.subr.bf16.mxu0 0
          %471 = vmatpush1.bf16.msra.mxu0 0
          %472 = vmatprep.subr.bf16.mxu0 0
          %473 = vmatpush1.bf16.msra.mxu0 0
          %474 = vmatprep.subr.bf16.mxu0 0
          %475 = vmatpush1.bf16.msra.mxu0 0
          %476 = vmatprep.subr.bf16.mxu0 0
          %477 = vmatpush1.bf16.msra.mxu0 0
          %478 = vmatprep.mubr.bf16.mxu0 0
          %479 = vmatmul.mubr.bf16.gmra.mrb[0].mxu0 %v444
          %v480 = vpop.f32.mrb[0].mxu0
          %v481 = vadd.f32 0.0, %v480
          %v482 = vpop.f32.mrb[0].mxu0
          %v483 = vpop.f32.mrb[0].mxu0
          %v484 = vpop.f32.mrb[0].mxu0
          %485 = vdwg.mxu0
          %v486 = vpack.c.bf16 %v481, %v481
          %487 = vst [vmem:[#allocation2] sm:$0xf] %v486
        $region68: #{tpu_custom_call.1} parent=43 // pred_fallthru
          _
        %v488 = vld [vmem:[%s342] sm:$0xf]
        %v489 = vld [vmem:[#allocation9] sm:$0xf]
        %v490 = vld [vmem:[#allocation9 + $0x4] sm:$0xf]
        %v491 = vld [vmem:[#allocation9 + $0x8] sm:$0xf]
        %v492 = vld [vmem:[#allocation9 + $0xc] sm:$0xf]
        %v493 = vld [vmem:[#allocation9 + $0x10] sm:$0xf]
        %v494 = vld [vmem:[#allocation9 + $0x14] sm:$0xf]
        %v495 = vld [vmem:[#allocation9 + $0x18] sm:$0xf]
        %v496 = vld [vmem:[#allocation9 + $0x1c] sm:$0xf]
        %v505 = vunpack.c.l.b16 %v489
        %v506 = vunpack.c.l.b16 %v490
        %v507 = vunpack.c.l.b16 %v491
        %v508 = vunpack.c.l.b16 %v492
        %v509 = vunpack.c.l.b16 %v493
        %v510 = vunpack.c.l.b16 %v494
        %v511 = vunpack.c.l.b16 %v495
        %v512 = vunpack.c.l.b16 %v496
        %v513 = vpack.c.b16 %v506, %v505
        %v514 = vpack.c.b16 %v508, %v507
        %v515 = vpack.c.b16 %v510, %v509
        %v516 = vpack.c.b16 %v512, %v511
        %vm521 = vcmask 523264
        %v523 = vsel %vm521, %v488, 0
        %525 = vmatprep.subr.bf16.mxu0 0
        %526 = vmatpush1.bf16.msra.mxu0 %v513
        %527 = vmatprep.subr.bf16.mxu0 0
        %528 = vmatpush1.bf16.msra.mxu0 %v514
        %529 = vmatprep.subr.bf16.mxu0 0
        %530 = vmatpush1.bf16.msra.mxu0 %v515
        %531 = vmatprep.subr.bf16.mxu0 0
        %532 = vmatpush1.bf16.msra.mxu0 %v516
        %533 = vmatprep.subr.bf16.mxu0 0
        %534 = vmatpush1.bf16.msra.mxu0 0
        %535 = vmatprep.subr.bf16.mxu0 0
        %536 = vmatpush1.bf16.msra.mxu0 0
        %537 = vmatprep.subr.bf16.mxu0 0
        %538 = vmatpush1.bf16.msra.mxu0 0
        %539 = vmatprep.subr.bf16.mxu0 0
        %540 = vmatpush1.bf16.msra.mxu0 0
        %541 = vmatprep.subr.bf16.mxu0 0
        %542 = vmatpush1.bf16.msra.mxu0 0
        %543 = vmatprep.subr.bf16.mxu0 0
        %544 = vmatpush1.bf16.msra.mxu0 0
        %545 = vmatprep.subr.bf16.mxu0 0
        %546 = vmatpush1.bf16.msra.mxu0 0
        %547 = vmatprep.subr.bf16.mxu0 0
        %548 = vmatpush1.bf16.msra.mxu0 0
        %549 = vmatprep.subr.bf16.mxu0 0
        %550 = vmatpush1.bf16.msra.mxu0 0
        %551 = vmatprep.subr.bf16.mxu0 0
        %552 = vmatpush1.bf16.msra.mxu0 0
        %553 = vmatprep.subr.bf16.mxu0 0
        %554 = vmatpush1.bf16.msra.mxu0 0
        %555 = vmatprep.subr.bf16.mxu0 0
        %556 = vmatpush1.bf16.msra.mxu0 0
        %557 = vmatprep.mubr.bf16.mxu0 0
        %558 = vmatmul.mubr.bf16.gmra.mrb[0].mxu0 %v523
        %v559 = vpop.f32.mrb[0].mxu0
        %v560 = vadd.f32 0.0, %v559
        %v561 = vpop.f32.mrb[0].mxu0
        %v562 = vpop.f32.mrb[0].mxu0
        %v563 = vpop.f32.mrb[0].mxu0
        %564 = vdwg.mxu0
        %v565 = vpack.c.bf16 %v560, %v560
        %v566 = vld [vmem:[#allocation2] sm:$0xf]
        %vm567 = vcmask 64512
        %v569 = vsel %vm567, %v565, 0
        %v572 = vsel %vm567, %v566, 0
        %574 = vmatprep.subr.bf16.mxu0 0
        %575 = vmatpush1.bf16.xpose.msra.mxu0 %v572
        %576 = vmatprep.subr.bf16.mxu0 0
        %577 = vmatpush1.bf16.xpose.msra.mxu0 0
        %578 = vmatprep.subr.bf16.mxu0 0
        %579 = vmatpush1.bf16.xpose.msra.mxu0 0
        %580 = vmatprep.subr.bf16.mxu0 0
        %581 = vmatpush1.bf16.xpose.msra.mxu0 0
        %582 = vmatprep.subr.bf16.mxu0 0
        %583 = vmatpush1.bf16.xpose.msra.mxu0 0
        %584 = vmatprep.subr.bf16.mxu0 0
        %585 = vmatpush1.bf16.xpose.msra.mxu0 0
        %586 = vmatprep.subr.bf16.mxu0 0
        %587 = vmatpush1.bf16.xpose.msra.mxu0 0
        %588 = vmatprep.subr.bf16.mxu0 0
        %589 = vmatpush1.bf16.xpose.msra.mxu0 0
        %590 = vmatprep.subr.bf16.mxu0 0
        %591 = vmatpush1.bf16.xpose.msra.mxu0 0
        %592 = vmatprep.subr.bf16.mxu0 0
        %593 = vmatpush1.bf16.xpose.msra.mxu0 0
        %594 = vmatprep.subr.bf16.mxu0 0
        %595 = vmatpush1.bf16.xpose.msra.mxu0 0
        %596 = vmatprep.subr.bf16.mxu0 0
        %597 = vmatpush1.bf16.xpose.msra.mxu0 0
        %598 = vmatprep.subr.bf16.mxu0 0
        %599 = vmatpush1.bf16.xpose.msra.mxu0 0
        %600 = vmatprep.subr.bf16.mxu0 0
        %601 = vmatpush1.bf16.xpose.msra.mxu0 0
        %602 = vmatprep.subr.bf16.mxu0 0
        %603 = vmatpush1.bf16.xpose.msra.mxu0 0
        %604 = vmatprep.subr.bf16.mxu0 0
        %605 = vmatpush1.bf16.xpose.msra.mxu0 0
        %606 = vmatprep.mubr.bf16.mxu0 0
        %607 = vmatmul.mubr.bf16.gmra.mrb[0].mxu0 %v569
        %v608 = vpop.f32.mrb[0].mxu0
        %v609 = vadd.f32 0.0, %v608
        %v610 = vpop.f32.mrb[0].mxu0
        %v611 = vpop.f32.mrb[0].mxu0
        %v612 = vpop.f32.mrb[0].mxu0
        %613 = vdwg.mxu0
        %v614 = vsel %vm567, %v609, -inf
        %615 = vmax.xlane.f32.xlu0 %v614
        %v616 = vpop.xlane.xlu0 %615
        %v617 = vsub.f32 %v609, %v616
        %v618 = vmul.f32 %v617, 1.442695
        %v619 = vpow.pop %v618
        %v620 = vsel %vm567, %v619, 0.0
        %621 = vadd.xlane.f32.xlu0 %v620
        %v622 = vpop.xlane.xlu0 %621
        %v623 = vrcp.pop %v622
        %v624 = vmul.f32 %v619, %v623
        %v625 = vpack.c.bf16 %v624, %v624
        %vm626 = vcmask 60416
        %627 = vst.msk [vmem:[%s403] sm:$0xf] %vm626, %v625
        %v629 = vunpack.c.l.b16 %v566
        %v630 = vpack.c.b16 %v629, %v629
        %631 = vrot.lane.b32.xlu0 %v630, 64
        %v632 = vpop.permute.xlu0 %631
        %v634 = vsel %vm567, %v625, 0
        %vm636 = vcmask 1043456
        %v638 = vsel %vm636, %v632, 0
        %640 = vmatprep.subr.bf16.mxu0 0
        %641 = vmatpush1.bf16.msra.mxu0 %v638
        %642 = vmatprep.subr.bf16.mxu0 0
        %643 = vmatpush1.bf16.msra.mxu0 0
        %644 = vmatprep.subr.bf16.mxu0 0
        %645 = vmatpush1.bf16.msra.mxu0 0
        %646 = vmatprep.subr.bf16.mxu0 0
        %647 = vmatpush1.bf16.msra.mxu0 0
        %648 = vmatprep.subr.bf16.mxu0 0
        %649 = vmatpush1.bf16.msra.mxu0 0
        %650 = vmatprep.subr.bf16.mxu0 0
        %651 = vmatpush1.bf16.msra.mxu0 0
        %652 = vmatprep.subr.bf16.mxu0 0
        %653 = vmatpush1.bf16.msra.mxu0 0
        %654 = vmatprep.subr.bf16.mxu0 0
        %655 = vmatpush1.bf16.msra.mxu0 0
        %656 = vmatprep.subr.bf16.mxu0 0
        %657 = vmatpush1.bf16.msra.mxu0 0
        %658 = vmatprep.subr.bf16.mxu0 0
        %659 = vmatpush1.bf16.msra.mxu0 0
        %660 = vmatprep.subr.bf16.mxu0 0
        %661 = vmatpush1.bf16.msra.mxu0 0
        %662 = vmatprep.subr.bf16.mxu0 0
        %663 = vmatpush1.bf16.msra.mxu0 0
        %664 = vmatprep.subr.bf16.mxu0 0
        %665 = vmatpush1.bf16.msra.mxu0 0
        %666 = vmatprep.subr.bf16.mxu0 0
        %667 = vmatpush1.bf16.msra.mxu0 0
        %668 = vmatprep.subr.bf16.mxu0 0
        %669 = vmatpush1.bf16.msra.mxu0 0
        %670 = vmatprep.subr.bf16.mxu0 0
        %671 = vmatpush1.bf16.msra.mxu0 0
        %672 = vmatprep.mubr.bf16.mxu0 0
        %673 = vmatmul.mubr.bf16.gmra.mrb[0].mxu0 %v634
        %v674 = vpop.f32.mrb[0].mxu0
        %v675 = vadd.f32 0.0, %v674
        %v676 = vpop.f32.mrb[0].mxu0
        %v677 = vpop.f32.mrb[0].mxu0
        %v678 = vpop.f32.mrb[0].mxu0
        %679 = vdwg.mxu0
        %v680 = vpack.c.bf16 %v675, %v675
        %681 = vst.msk [vmem:[#allocation3] sm:$0xf] %vm626, %v680
        %v682 = vld [vmem:[#allocation2] sm:$0xf]
        %684 = vrot.lane.b32.xlu0 %v565, 120
        %v685 = vpop.permute.xlu0 %684
        %v687 = vunpack.c.l.b16 %v682
        %v688 = vpack.c.b16 %v687, %v687
        %689 = vrot.lane.b32.xlu0 %v688, 120
        %v690 = vpop.permute.xlu0 %689
        %v692 = vsel %vm567, %v685, 0
        %v695 = vsel %vm567, %v690, 0
        %697 = vmatprep.subr.bf16.mxu0 0
        %698 = vmatpush1.bf16.xpose.msra.mxu0 %v695
        %699 = vmatprep.subr.bf16.mxu0 0
        %700 = vmatpush1.bf16.xpose.msra.mxu0 0
        %701 = vmatprep.subr.bf16.mxu0 0
        %702 = vmatpush1.bf16.xpose.msra.mxu0 0
        %703 = vmatprep.subr.bf16.mxu0 0
        %704 = vmatpush1.bf16.xpose.msra.mxu0 0
        %705 = vmatprep.subr.bf16.mxu0 0
        %706 = vmatpush1.bf16.xpose.msra.mxu0 0
        %707 = vmatprep.subr.bf16.mxu0 0
        %708 = vmatpush1.bf16.xpose.msra.mxu0 0
        %709 = vmatprep.subr.bf16.mxu0 0
        %710 = vmatpush1.bf16.xpose.msra.mxu0 0
        %711 = vmatprep.subr.bf16.mxu0 0
        %712 = vmatpush1.bf16.xpose.msra.mxu0 0
        %713 = vmatprep.subr.bf16.mxu0 0
        %714 = vmatpush1.bf16.xpose.msra.mxu0 0
        %715 = vmatprep.subr.bf16.mxu0 0
        %716 = vmatpush1.bf16.xpose.msra.mxu0 0
        %717 = vmatprep.subr.bf16.mxu0 0
        %718 = vmatpush1.bf16.xpose.msra.mxu0 0
        %719 = vmatprep.subr.bf16.mxu0 0
        %720 = vmatpush1.bf16.xpose.msra.mxu0 0
        %721 = vmatprep.subr.bf16.mxu0 0
        %722 = vmatpush1.bf16.xpose.msra.mxu0 0
        %723 = vmatprep.subr.bf16.mxu0 0
        %724 = vmatpush1.bf16.xpose.msra.mxu0 0
        %725 = vmatprep.subr.bf16.mxu0 0
        %726 = vmatpush1.bf16.xpose.msra.mxu0 0
        %727 = vmatprep.subr.bf16.mxu0 0
        %728 = vmatpush1.bf16.xpose.msra.mxu0 0
        %729 = vmatprep.mubr.bf16.mxu0 0
        %730 = vmatmul.mubr.bf16.gmra.mrb[0].mxu0 %v692
        %v731 = vpop.f32.mrb[0].mxu0
        %v732 = vadd.f32 0.0, %v731
        %v733 = vpop.f32.mrb[0].mxu0
        %v734 = vpop.f32.mrb[0].mxu0
        %v735 = vpop.f32.mrb[0].mxu0
        %736 = vdwg.mxu0
        %v737 = vsel %vm567, %v732, -inf
        %738 = vmax.xlane.f32.xlu0 %v737
        %v739 = vpop.xlane.xlu0 %738
        %v740 = vsub.f32 %v732, %v739
        %v741 = vmul.f32 %v740, 1.442695
        %v742 = vpow.pop %v741
        %v743 = vsel %vm567, %v742, 0.0
        %744 = vadd.xlane.f32.xlu0 %v743
        %v745 = vpop.xlane.xlu0 %744
        %v746 = vrcp.pop %v745
        %v747 = vmul.f32 %v742, %v746
        %v748 = vpack.c.bf16 %v747, %v747
        %s749 = scalar_lea.vmem %s403, 4 [#allocation14]
        %750 = vst.msk [vmem:[%s749] sm:$0xf] %vm626, %v748
        %751 = vrot.lane.b32.xlu0 %v688, 56
        %v752 = vpop.permute.xlu0 %751
        %v754 = vsel %vm567, %v748, 0
        %v757 = vsel %vm636, %v752, 0
        %759 = vmatprep.subr.bf16.mxu0 0
        %760 = vmatpush1.bf16.msra.mxu0 %v757
        %761 = vmatprep.subr.bf16.mxu0 0
        %762 = vmatpush1.bf16.msra.mxu0 0
        %763 = vmatprep.subr.bf16.mxu0 0
        %764 = vmatpush1.bf16.msra.mxu0 0
        %765 = vmatprep.subr.bf16.mxu0 0
        %766 = vmatpush1.bf16.msra.mxu0 0
        %767 = vmatprep.subr.bf16.mxu0 0
        %768 = vmatpush1.bf16.msra.mxu0 0
        %769 = vmatprep.subr.bf16.mxu0 0
        %770 = vmatpush1.bf16.msra.mxu0 0
        %771 = vmatprep.subr.bf16.mxu0 0
        %772 = vmatpush1.bf16.msra.mxu0 0
        %773 = vmatprep.subr.bf16.mxu0 0
        %774 = vmatpush1.bf16.msra.mxu0 0
        %775 = vmatprep.subr.bf16.mxu0 0
        %776 = vmatpush1.bf16.msra.mxu0 0
        %777 = vmatprep.subr.bf16.mxu0 0
        %778 = vmatpush1.bf16.msra.mxu0 0
        %779 = vmatprep.subr.bf16.mxu0 0
        %780 = vmatpush1.bf16.msra.mxu0 0
        %781 = vmatprep.subr.bf16.mxu0 0
        %782 = vmatpush1.bf16.msra.mxu0 0
        %783 = vmatprep.subr.bf16.mxu0 0
        %784 = vmatpush1.bf16.msra.mxu0 0
        %785 = vmatprep.subr.bf16.mxu0 0
        %786 = vmatpush1.bf16.msra.mxu0 0
        %787 = vmatprep.subr.bf16.mxu0 0
        %788 = vmatpush1.bf16.msra.mxu0 0
        %789 = vmatprep.subr.bf16.mxu0 0
        %790 = vmatpush1.bf16.msra.mxu0 0
        %791 = vmatprep.mubr.bf16.mxu0 0
        %792 = vmatmul.mubr.bf16.gmra.mrb[0].mxu0 %v754
        %v793 = vpop.f32.mrb[0].mxu0
        %v794 = vadd.f32 0.0, %v793
        %v795 = vpop.f32.mrb[0].mxu0
        %v796 = vpop.f32.mrb[0].mxu0
        %v797 = vpop.f32.mrb[0].mxu0
        %798 = vdwg.mxu0
        %v799 = vpack.c.bf16 %v794, %v794
        %v801 = vunpack.c.l.b16 %v799
        %v802 = vpack.c.b16 %v801, %v801
        %803 = vrot.lane.b32.xlu0 %v802, 8
        %v804 = vpop.permute.xlu0 %803
        %vm806 = vcmask 126016
        %807 = vst.msk [vmem:[#allocation3] sm:$0xf] %vm806, %v804
        %v808 = vld [vmem:[#allocation2] sm:$0xf]
        %809 = vrot.lane.b32.xlu0 %v565, 112
        %v810 = vpop.permute.xlu0 %809
        %v812 = vunpack.c.l.b16 %v808
        %v813 = vpack.c.b16 %v812, %v812
        %814 = vrot.lane.b32.xlu0 %v813, 112
        %v815 = vpop.permute.xlu0 %814
        %v817 = vsel %vm567, %v810, 0
        %v820 = vsel %vm567, %v815, 0
        %822 = vmatprep.subr.bf16.mxu0 0
        %823 = vmatpush1.bf16.xpose.msra.mxu0 %v820
        %824 = vmatprep.subr.bf16.mxu0 0
        %825 = vmatpush1.bf16.xpose.msra.mxu0 0
        %826 = vmatprep.subr.bf16.mxu0 0
        %827 = vmatpush1.bf16.xpose.msra.mxu0 0
        %828 = vmatprep.subr.bf16.mxu0 0
        %829 = vmatpush1.bf16.xpose.msra.mxu0 0
        %830 = vmatprep.subr.bf16.mxu0 0
        %831 = vmatpush1.bf16.xpose.msra.mxu0 0
        %832 = vmatprep.subr.bf16.mxu0 0
        %833 = vmatpush1.bf16.xpose.msra.mxu0 0
        %834 = vmatprep.subr.bf16.mxu0 0
        %835 = vmatpush1.bf16.xpose.msra.mxu0 0
        %836 = vmatprep.subr.bf16.mxu0 0
        %837 = vmatpush1.bf16.xpose.msra.mxu0 0
        %838 = vmatprep.subr.bf16.mxu0 0
        %839 = vmatpush1.bf16.xpose.msra.mxu0 0
        %840 = vmatprep.subr.bf16.mxu0 0
        %841 = vmatpush1.bf16.xpose.msra.mxu0 0
        %842 = vmatprep.subr.bf16.mxu0 0
        %843 = vmatpush1.bf16.xpose.msra.mxu0 0
        %844 = vmatprep.subr.bf16.mxu0 0
        %845 = vmatpush1.bf16.xpose.msra.mxu0 0
        %846 = vmatprep.subr.bf16.mxu0 0
        %847 = vmatpush1.bf16.xpose.msra.mxu0 0
        %848 = vmatprep.subr.bf16.mxu0 0
        %849 = vmatpush1.bf16.xpose.msra.mxu0 0
        %850 = vmatprep.subr.bf16.mxu0 0
        %851 = vmatpush1.bf16.xpose.msra.mxu0 0
        %852 = vmatprep.subr.bf16.mxu0 0
        %853 = vmatpush1.bf16.xpose.msra.mxu0 0
        %854 = vmatprep.mubr.bf16.mxu0 0
        %855 = vmatmul.mubr.bf16.gmra.mrb[0].mxu0 %v817
        %v856 = vpop.f32.mrb[0].mxu0
        %v857 = vadd.f32 0.0, %v856
        %v858 = vpop.f32.mrb[0].mxu0
        %v859 = vpop.f32.mrb[0].mxu0
        %v860 = vpop.f32.mrb[0].mxu0
        %861 = vdwg.mxu0
        %v862 = vsel %vm567, %v857, -inf
        %863 = vmax.xlane.f32.xlu0 %v862
        %v864 = vpop.xlane.xlu0 %863
        %v865 = vsub.f32 %v857, %v864
        %v866 = vmul.f32 %v865, 1.442695
        %v867 = vpow.pop %v866
        %v868 = vsel %vm567, %v867, 0.0
        %869 = vadd.xlane.f32.xlu0 %v868
        %v870 = vpop.xlane.xlu0 %869
        %v871 = vrcp.pop %v870
        %v872 = vmul.f32 %v867, %v871
        %v873 = vpack.c.bf16 %v872, %v872
        %s874 = scalar_lea.vmem %s403, 8 [#allocation14]
        %875 = vst.msk [vmem:[%s874] sm:$0xf] %vm626, %v873
        %876 = vrot.lane.b32.xlu0 %v813, 48
        %v877 = vpop.permute.xlu0 %876
        %v879 = vsel %vm567, %v873, 0
        %v882 = vsel %vm636, %v877, 0
        %884 = vmatprep.subr.bf16.mxu0 0
        %885 = vmatpush1.bf16.msra.mxu0 %v882
        %886 = vmatprep.subr.bf16.mxu0 0
        %887 = vmatpush1.bf16.msra.mxu0 0
        %888 = vmatprep.subr.bf16.mxu0 0
        %889 = vmatpush1.bf16.msra.mxu0 0
        %890 = vmatprep.subr.bf16.mxu0 0
        %891 = vmatpush1.bf16.msra.mxu0 0
        %892 = vmatprep.subr.bf16.mxu0 0
        %893 = vmatpush1.bf16.msra.mxu0 0
        %894 = vmatprep.subr.bf16.mxu0 0
        %895 = vmatpush1.bf16.msra.mxu0 0
        %896 = vmatprep.subr.bf16.mxu0 0
        %897 = vmatpush1.bf16.msra.mxu0 0
        %898 = vmatprep.subr.bf16.mxu0 0
        %899 = vmatpush1.bf16.msra.mxu0 0
        %900 = vmatprep.subr.bf16.mxu0 0
        %901 = vmatpush1.bf16.msra.mxu0 0
        %902 = vmatprep.subr.bf16.mxu0 0
        %903 = vmatpush1.bf16.msra.mxu0 0
        %904 = vmatprep.subr.bf16.mxu0 0
        %905 = vmatpush1.bf16.msra.mxu0 0
        %906 = vmatprep.subr.bf16.mxu0 0
        %907 = vmatpush1.bf16.msra.mxu0 0
        %908 = vmatprep.subr.bf16.mxu0 0
        %909 = vmatpush1.bf16.msra.mxu0 0
        %910 = vmatprep.subr.bf16.mxu0 0
        %911 = vmatpush1.bf16.msra.mxu0 0
        %912 = vmatprep.subr.bf16.mxu0 0
        %913 = vmatpush1.bf16.msra.mxu0 0
        %914 = vmatprep.subr.bf16.mxu0 0
        %915 = vmatpush1.bf16.msra.mxu0 0
        %916 = vmatprep.mubr.bf16.mxu0 0
        %917 = vmatmul.mubr.bf16.gmra.mrb[0].mxu0 %v879
        %v918 = vpop.f32.mrb[0].mxu0
        %v919 = vadd.f32 0.0, %v918
        %v920 = vpop.f32.mrb[0].mxu0
        %v921 = vpop.f32.mrb[0].mxu0
        %v922 = vpop.f32.mrb[0].mxu0
        %923 = vdwg.mxu0
        %v924 = vpack.c.bf16 %v919, %v919
        %v926 = vunpack.c.l.b16 %v924
        %v927 = vpack.c.b16 %v926, %v926
        %928 = vrot.lane.b32.xlu0 %v927, 16
        %v929 = vpop.permute.xlu0 %928
        %vm931 = vcmask 191616
        %932 = vst.msk [vmem:[#allocation3] sm:$0xf] %vm931, %v929
        %v933 = vld [vmem:[#allocation2] sm:$0xf]
        %934 = vrot.lane.b32.xlu0 %v565, 104
        %v935 = vpop.permute.xlu0 %934
        %v937 = vunpack.c.l.b16 %v933
        %v938 = vpack.c.b16 %v937, %v937
        %939 = vrot.lane.b32.xlu0 %v938, 104
        %v940 = vpop.permute.xlu0 %939
        %v942 = vsel %vm567, %v935, 0
        %v945 = vsel %vm567, %v940, 0
        %947 = vmatprep.subr.bf16.mxu0 0
        %948 = vmatpush1.bf16.xpose.msra.mxu0 %v945
        %949 = vmatprep.subr.bf16.mxu0 0
        %950 = vmatpush1.bf16.xpose.msra.mxu0 0
        %951 = vmatprep.subr.bf16.mxu0 0
        %952 = vmatpush1.bf16.xpose.msra.mxu0 0
        %953 = vmatprep.subr.bf16.mxu0 0
        %954 = vmatpush1.bf16.xpose.msra.mxu0 0
        %955 = vmatprep.subr.bf16.mxu0 0
        %956 = vmatpush1.bf16.xpose.msra.mxu0 0
        %957 = vmatprep.subr.bf16.mxu0 0
        %958 = vmatpush1.bf16.xpose.msra.mxu0 0
        %959 = vmatprep.subr.bf16.mxu0 0
        %960 = vmatpush1.bf16.xpose.msra.mxu0 0
        %961 = vmatprep.subr.bf16.mxu0 0
        %962 = vmatpush1.bf16.xpose.msra.mxu0 0
        %963 = vmatprep.subr.bf16.mxu0 0
        %964 = vmatpush1.bf16.xpose.msra.mxu0 0
        %965 = vmatprep.subr.bf16.mxu0 0
        %966 = vmatpush1.bf16.xpose.msra.mxu0 0
        %967 = vmatprep.subr.bf16.mxu0 0
        %968 = vmatpush1.bf16.xpose.msra.mxu0 0
        %969 = vmatprep.subr.bf16.mxu0 0
        %970 = vmatpush1.bf16.xpose.msra.mxu0 0
        %971 = vmatprep.subr.bf16.mxu0 0
        %972 = vmatpush1.bf16.xpose.msra.mxu0 0
        %973 = vmatprep.subr.bf16.mxu0 0
        %974 = vmatpush1.bf16.xpose.msra.mxu0 0
        %975 = vmatprep.subr.bf16.mxu0 0
        %976 = vmatpush1.bf16.xpose.msra.mxu0 0
        %977 = vmatprep.subr.bf16.mxu0 0
        %978 = vmatpush1.bf16.xpose.msra.mxu0 0
        %979 = vmatprep.mubr.bf16.mxu0 0
        %980 = vmatmul.mubr.bf16.gmra.mrb[0].mxu0 %v942
        %v981 = vpop.f32.mrb[0].mxu0
        %v982 = vadd.f32 0.0, %v981
        %v983 = vpop.f32.mrb[0].mxu0
        %v984 = vpop.f32.mrb[0].mxu0
        %v985 = vpop.f32.mrb[0].mxu0
        %986 = vdwg.mxu0
        %v987 = vsel %vm567, %v982, -inf
        %988 = vmax.xlane.f32.xlu0 %v987
        %v989 = vpop.xlane.xlu0 %988
        %v990 = vsub.f32 %v982, %v989
        %v991 = vmul.f32 %v990, 1.442695
        %v992 = vpow.pop %v991
        %v993 = vsel %vm567, %v992, 0.0
        %994 = vadd.xlane.f32.xlu0 %v993
        %v995 = vpop.xlane.xlu0 %994
        %v996 = vrcp.pop %v995
        %v997 = vmul.f32 %v992, %v996
        %v998 = vpack.c.bf16 %v997, %v997
        %s999 = scalar_lea.vmem %s403, 12 [#allocation14]
        %1000 = vst.msk [vmem:[%s999] sm:$0xf] %vm626, %v998
        %1001 = vrot.lane.b32.xlu0 %v938, 40
        %v1002 = vpop.permute.xlu0 %1001
        %v1004 = vsel %vm567, %v998, 0
        %v1007 = vsel %vm636, %v1002, 0
        %1009 = vmatprep.subr.bf16.mxu0 0
        %1010 = vmatpush1.bf16.msra.mxu0 %v1007
        %1011 = vmatprep.subr.bf16.mxu0 0
        %1012 = vmatpush1.bf16.msra.mxu0 0
        %1013 = vmatprep.subr.bf16.mxu0 0
        %1014 = vmatpush1.bf16.msra.mxu0 0
        %1015 = vmatprep.subr.bf16.mxu0 0
        %1016 = vmatpush1.bf16.msra.mxu0 0
        %1017 = vmatprep.subr.bf16.mxu0 0
        %1018 = vmatpush1.bf16.msra.mxu0 0
        %1019 = vmatprep.subr.bf16.mxu0 0
        %1020 = vmatpush1.bf16.msra.mxu0 0
        %1021 = vmatprep.subr.bf16.mxu0 0
        %1022 = vmatpush1.bf16.msra.mxu0 0
        %1023 = vmatprep.subr.bf16.mxu0 0
        %1024 = vmatpush1.bf16.msra.mxu0 0
        %1025 = vmatprep.subr.bf16.mxu0 0
        %1026 = vmatpush1.bf16.msra.mxu0 0
        %1027 = vmatprep.subr.bf16.mxu0 0
        %1028 = vmatpush1.bf16.msra.mxu0 0
        %1029 = vmatprep.subr.bf16.mxu0 0
        %1030 = vmatpush1.bf16.msra.mxu0 0
        %1031 = vmatprep.subr.bf16.mxu0 0
        %1032 = vmatpush1.bf16.msra.mxu0 0
        %1033 = vmatprep.subr.bf16.mxu0 0
        %1034 = vmatpush1.bf16.msra.mxu0 0
        %1035 = vmatprep.subr.bf16.mxu0 0
        %1036 = vmatpush1.bf16.msra.mxu0 0
        %1037 = vmatprep.subr.bf16.mxu0 0
        %1038 = vmatpush1.bf16.msra.mxu0 0
        %1039 = vmatprep.subr.bf16.mxu0 0
        %1040 = vmatpush1.bf16.msra.mxu0 0
        %1041 = vmatprep.mubr.bf16.mxu0 0
        %1042 = vmatmul.mubr.bf16.gmra.mrb[0].mxu0 %v1004
        %v1043 = vpop.f32.mrb[0].mxu0
        %v1044 = vadd.f32 0.0, %v1043
        %v1045 = vpop.f32.mrb[0].mxu0
        %v1046 = vpop.f32.mrb[0].mxu0
        %v1047 = vpop.f32.mrb[0].mxu0
        %1048 = vdwg.mxu0
        %v1049 = vpack.c.bf16 %v1044, %v1044
        %v1051 = vunpack.c.l.b16 %v1049
        %v1052 = vpack.c.b16 %v1051, %v1051
        %1053 = vrot.lane.b32.xlu0 %v1052, 24
        %v1054 = vpop.permute.xlu0 %1053
        %vm1056 = vcmask 257216
        %1057 = vst.msk [vmem:[#allocation3] sm:$0xf] %vm1056, %v1054
        %v1058 = vld [vmem:[#allocation2] sm:$0xf]
        %1059 = vrot.lane.b32.xlu0 %v565, 96
        %v1060 = vpop.permute.xlu0 %1059
        %v1062 = vunpack.c.l.b16 %v1058
        %v1063 = vpack.c.b16 %v1062, %v1062
        %1064 = vrot.lane.b32.xlu0 %v1063, 96
        %v1065 = vpop.permute.xlu0 %1064
        %v1067 = vsel %vm567, %v1060, 0
        %v1070 = vsel %vm567, %v1065, 0
        %1072 = vmatprep.subr.bf16.mxu0 0
        %1073 = vmatpush1.bf16.xpose.msra.mxu0 %v1070
        %1074 = vmatprep.subr.bf16.mxu0 0
        %1075 = vmatpush1.bf16.xpose.msra.mxu0 0
        %1076 = vmatprep.subr.bf16.mxu0 0
        %1077 = vmatpush1.bf16.xpose.msra.mxu0 0
        %1078 = vmatprep.subr.bf16.mxu0 0
        %1079 = vmatpush1.bf16.xpose.msra.mxu0 0
        %1080 = vmatprep.subr.bf16.mxu0 0
        %1081 = vmatpush1.bf16.xpose.msra.mxu0 0
        %1082 = vmatprep.subr.bf16.mxu0 0
        %1083 = vmatpush1.bf16.xpose.msra.mxu0 0
        %1084 = vmatprep.subr.bf16.mxu0 0
        %1085 = vmatpush1.bf16.xpose.msra.mxu0 0
        %1086 = vmatprep.subr.bf16.mxu0 0
        %1087 = vmatpush1.bf16.xpose.msra.mxu0 0
        %1088 = vmatprep.subr.bf16.mxu0 0
        %1089 = vmatpush1.bf16.xpose.msra.mxu0 0
        %1090 = vmatprep.subr.bf16.mxu0 0
        %1091 = vmatpush1.bf16.xpose.msra.mxu0 0
        %1092 = vmatprep.subr.bf16.mxu0 0
        %1093 = vmatpush1.bf16.xpose.msra.mxu0 0
        %1094 = vmatprep.subr.bf16.mxu0 0
        %1095 = vmatpush1.bf16.xpose.msra.mxu0 0
        %1096 = vmatprep.subr.bf16.mxu0 0
        %1097 = vmatpush1.bf16.xpose.msra.mxu0 0
        %1098 = vmatprep.subr.bf16.mxu0 0
        %1099 = vmatpush1.bf16.xpose.msra.mxu0 0
        %1100 = vmatprep.subr.bf16.mxu0 0
        %1101 = vmatpush1.bf16.xpose.msra.mxu0 0
        %1102 = vmatprep.subr.bf16.mxu0 0
        %1103 = vmatpush1.bf16.xpose.msra.mxu0 0
        %1104 = vmatprep.mubr.bf16.mxu0 0
        %1105 = vmatmul.mubr.bf16.gmra.mrb[0].mxu0 %v1067
        %v1106 = vpop.f32.mrb[0].mxu0
        %v1107 = vadd.f32 0.0, %v1106
        %v1108 = vpop.f32.mrb[0].mxu0
        %v1109 = vpop.f32.mrb[0].mxu0
        %v1110 = vpop.f32.mrb[0].mxu0
        %1111 = vdwg.mxu0
        %v1112 = vsel %vm567, %v1107, -inf
        %1113 = vmax.xlane.f32.xlu0 %v1112
        %v1114 = vpop.xlane.xlu0 %1113
        %v1115 = vsub.f32 %v1107, %v1114
        %v1116 = vmul.f32 %v1115, 1.442695
        %v1117 = vpow.pop %v1116
        %v1118 = vsel %vm567, %v1117, 0.0
        %1119 = vadd.xlane.f32.xlu0 %v1118
        %v1120 = vpop.xlane.xlu0 %1119
        %v1121 = vrcp.pop %v1120
        %v1122 = vmul.f32 %v1117, %v1121
        %v1123 = vpack.c.bf16 %v1122, %v1122
        %s1124 = scalar_lea.vmem %s403, 16 [#allocation14]
        %1125 = vst.msk [vmem:[%s1124] sm:$0xf] %vm626, %v1123
        %1126 = vrot.lane.b32.xlu0 %v1063, 32
        %v1127 = vpop.permute.xlu0 %1126
        %v1129 = vsel %vm567, %v1123, 0
        %v1132 = vsel %vm636, %v1127, 0
        %1134 = vmatprep.subr.bf16.mxu0 0
        %1135 = vmatpush1.bf16.msra.mxu0 %v1132
        %1136 = vmatprep.subr.bf16.mxu0 0
        %1137 = vmatpush1.bf16.msra.mxu0 0
        %1138 = vmatprep.subr.bf16.mxu0 0
        %1139 = vmatpush1.bf16.msra.mxu0 0
        %1140 = vmatprep.subr.bf16.mxu0 0
        %1141 = vmatpush1.bf16.msra.mxu0 0
        %1142 = vmatprep.subr.bf16.mxu0 0
        %1143 = vmatpush1.bf16.msra.mxu0 0
        %1144 = vmatprep.subr.bf16.mxu0 0
        %1145 = vmatpush1.bf16.msra.mxu0 0
        %1146 = vmatprep.subr.bf16.mxu0 0
        %1147 = vmatpush1.bf16.msra.mxu0 0
        %1148 = vmatprep.subr.bf16.mxu0 0
        %1149 = vmatpush1.bf16.msra.mxu0 0
        %1150 = vmatprep.subr.bf16.mxu0 0
        %1151 = vmatpush1.bf16.msra.mxu0 0
        %1152 = vmatprep.subr.bf16.mxu0 0
        %1153 = vmatpush1.bf16.msra.mxu0 0
        %1154 = vmatprep.subr.bf16.mxu0 0
        %1155 = vmatpush1.bf16.msra.mxu0 0
        %1156 = vmatprep.subr.bf16.mxu0 0
        %1157 = vmatpush1.bf16.msra.mxu0 0
        %1158 = vmatprep.subr.bf16.mxu0 0
        %1159 = vmatpush1.bf16.msra.mxu0 0
        %1160 = vmatprep.subr.bf16.mxu0 0
        %1161 = vmatpush1.bf16.msra.mxu0 0
        %1162 = vmatprep.subr.bf16.mxu0 0
        %1163 = vmatpush1.bf16.msra.mxu0 0
        %1164 = vmatprep.subr.bf16.mxu0 0
        %1165 = vmatpush1.bf16.msra.mxu0 0
        %1166 = vmatprep.mubr.bf16.mxu0 0
        %1167 = vmatmul.mubr.bf16.gmra.mrb[0].mxu0 %v1129
        %v1168 = vpop.f32.mrb[0].mxu0
        %v1169 = vadd.f32 0.0, %v1168
        %v1170 = vpop.f32.mrb[0].mxu0
        %v1171 = vpop.f32.mrb[0].mxu0
        %v1172 = vpop.f32.mrb[0].mxu0
        %1173 = vdwg.mxu0
        %v1174 = vpack.c.bf16 %v1169, %v1169
        %v1176 = vunpack.c.l.b16 %v1174
        %v1177 = vpack.c.b16 %v1176, %v1176
        %1178 = vrot.lane.b32.xlu0 %v1177, 32
        %v1179 = vpop.permute.xlu0 %1178
        %vm1181 = vcmask 322816
        %1182 = vst.msk [vmem:[#allocation3] sm:$0xf] %vm1181, %v1179
        %v1183 = vld [vmem:[#allocation2] sm:$0xf]
        %1184 = vrot.lane.b32.xlu0 %v565, 88
        %v1185 = vpop.permute.xlu0 %1184
        %v1187 = vunpack.c.l.b16 %v1183
        %v1188 = vpack.c.b16 %v1187, %v1187
        %1189 = vrot.lane.b32.xlu0 %v1188, 88
        %v1190 = vpop.permute.xlu0 %1189
        %v1192 = vsel %vm567, %v1185, 0
        %v1195 = vsel %vm567, %v1190, 0
        %1197 = vmatprep.subr.bf16.mxu0 0
        %1198 = vmatpush1.bf16.xpose.msra.mxu0 %v1195
        %1199 = vmatprep.subr.bf16.mxu0 0
        %1200 = vmatpush1.bf16.xpose.msra.mxu0 0
        %1201 = vmatprep.subr.bf16.mxu0 0
        %1202 = vmatpush1.bf16.xpose.msra.mxu0 0
        %1203 = vmatprep.subr.bf16.mxu0 0
        %1204 = vmatpush1.bf16.xpose.msra.mxu0 0
        %1205 = vmatprep.subr.bf16.mxu0 0
        %1206 = vmatpush1.bf16.xpose.msra.mxu0 0
        %1207 = vmatprep.subr.bf16.mxu0 0
        %1208 = vmatpush1.bf16.xpose.msra.mxu0 0
        %1209 = vmatprep.subr.bf16.mxu0 0
        %1210 = vmatpush1.bf16.xpose.msra.mxu0 0
        %1211 = vmatprep.subr.bf16.mxu0 0
        %1212 = vmatpush1.bf16.xpose.msra.mxu0 0
        %1213 = vmatprep.subr.bf16.mxu0 0
        %1214 = vmatpush1.bf16.xpose.msra.mxu0 0
        %1215 = vmatprep.subr.bf16.mxu0 0
        %1216 = vmatpush1.bf16.xpose.msra.mxu0 0
        %1217 = vmatprep.subr.bf16.mxu0 0
        %1218 = vmatpush1.bf16.xpose.msra.mxu0 0
        %1219 = vmatprep.subr.bf16.mxu0 0
        %1220 = vmatpush1.bf16.xpose.msra.mxu0 0
        %1221 = vmatprep.subr.bf16.mxu0 0
        %1222 = vmatpush1.bf16.xpose.msra.mxu0 0
        %1223 = vmatprep.subr.bf16.mxu0 0
        %1224 = vmatpush1.bf16.xpose.msra.mxu0 0
        %1225 = vmatprep.subr.bf16.mxu0 0
        %1226 = vmatpush1.bf16.xpose.msra.mxu0 0
        %1227 = vmatprep.subr.bf16.mxu0 0
        %1228 = vmatpush1.bf16.xpose.msra.mxu0 0
        %1229 = vmatprep.mubr.bf16.mxu0 0
        %1230 = vmatmul.mubr.bf16.gmra.mrb[0].mxu0 %v1192
        %v1231 = vpop.f32.mrb[0].mxu0
        %v1232 = vadd.f32 0.0, %v1231
        %v1233 = vpop.f32.mrb[0].mxu0
        %v1234 = vpop.f32.mrb[0].mxu0
        %v1235 = vpop.f32.mrb[0].mxu0
        %1236 = vdwg.mxu0
        %v1237 = vsel %vm567, %v1232, -inf
        %1238 = vmax.xlane.f32.xlu0 %v1237
        %v1239 = vpop.xlane.xlu0 %1238
        %v1240 = vsub.f32 %v1232, %v1239
        %v1241 = vmul.f32 %v1240, 1.442695
        %v1242 = vpow.pop %v1241
        %v1243 = vsel %vm567, %v1242, 0.0
        %1244 = vadd.xlane.f32.xlu0 %v1243
        %v1245 = vpop.xlane.xlu0 %1244
        %v1246 = vrcp.pop %v1245
        %v1247 = vmul.f32 %v1242, %v1246
        %v1248 = vpack.c.bf16 %v1247, %v1247
        %s1249 = scalar_lea.vmem %s403, 20 [#allocation14]
        %1250 = vst.msk [vmem:[%s1249] sm:$0xf] %vm626, %v1248
        %1251 = vrot.lane.b32.xlu0 %v1188, 24
        %v1252 = vpop.permute.xlu0 %1251
        %v1254 = vsel %vm567, %v1248, 0
        %v1257 = vsel %vm636, %v1252, 0
        %1259 = vmatprep.subr.bf16.mxu0 0
        %1260 = vmatpush1.bf16.msra.mxu0 %v1257
        %1261 = vmatprep.subr.bf16.mxu0 0
        %1262 = vmatpush1.bf16.msra.mxu0 0
        %1263 = vmatprep.subr.bf16.mxu0 0
        %1264 = vmatpush1.bf16.msra.mxu0 0
        %1265 = vmatprep.subr.bf16.mxu0 0
        %1266 = vmatpush1.bf16.msra.mxu0 0
        %1267 = vmatprep.subr.bf16.mxu0 0
        %1268 = vmatpush1.bf16.msra.mxu0 0
        %1269 = vmatprep.subr.bf16.mxu0 0
        %1270 = vmatpush1.bf16.msra.mxu0 0
        %1271 = vmatprep.subr.bf16.mxu0 0
        %1272 = vmatpush1.bf16.msra.mxu0 0
        %1273 = vmatprep.subr.bf16.mxu0 0
        %1274 = vmatpush1.bf16.msra.mxu0 0
        %1275 = vmatprep.subr.bf16.mxu0 0
        %1276 = vmatpush1.bf16.msra.mxu0 0
        %1277 = vmatprep.subr.bf16.mxu0 0
        %1278 = vmatpush1.bf16.msra.mxu0 0
        %1279 = vmatprep.subr.bf16.mxu0 0
        %1280 = vmatpush1.bf16.msra.mxu0 0
        %1281 = vmatprep.subr.bf16.mxu0 0
        %1282 = vmatpush1.bf16.msra.mxu0 0
        %1283 = vmatprep.subr.bf16.mxu0 0
        %1284 = vmatpush1.bf16.msra.mxu0 0
        %1285 = vmatprep.subr.bf16.mxu0 0
        %1286 = vmatpush1.bf16.msra.mxu0 0
        %1287 = vmatprep.subr.bf16.mxu0 0
        %1288 = vmatpush1.bf16.msra.mxu0 0
        %1289 = vmatprep.subr.bf16.mxu0 0
        %1290 = vmatpush1.bf16.msra.mxu0 0
        %1291 = vmatprep.mubr.bf16.mxu0 0
        %1292 = vmatmul.mubr.bf16.gmra.mrb[0].mxu0 %v1254
        %v1293 = vpop.f32.mrb[0].mxu0
        %v1294 = vadd.f32 0.0, %v1293
        %v1295 = vpop.f32.mrb[0].mxu0
        %v1296 = vpop.f32.mrb[0].mxu0
        %v1297 = vpop.f32.mrb[0].mxu0
        %1298 = vdwg.mxu0
        %v1299 = vpack.c.bf16 %v1294, %v1294
        %v1301 = vunpack.c.l.b16 %v1299
        %v1302 = vpack.c.b16 %v1301, %v1301
        %1303 = vrot.lane.b32.xlu0 %v1302, 40
        %v1304 = vpop.permute.xlu0 %1303
        %vm1306 = vcmask 388416
        %1307 = vst.msk [vmem:[#allocation3] sm:$0xf] %vm1306, %v1304
        %v1308 = vld [vmem:[#allocation2] sm:$0xf]
        %1309 = vrot.lane.b32.xlu0 %v565, 80
        %v1310 = vpop.permute.xlu0 %1309
        %v1312 = vunpack.c.l.b16 %v1308
        %v1313 = vpack.c.b16 %v1312, %v1312
        %1314 = vrot.lane.b32.xlu0 %v1313, 80
        %v1315 = vpop.permute.xlu0 %1314
        %v1317 = vsel %vm567, %v1310, 0
        %v1320 = vsel %vm567, %v1315, 0
        %1322 = vmatprep.subr.bf16.mxu0 0
        %1323 = vmatpush1.bf16.xpose.msra.mxu0 %v1320
        %1324 = vmatprep.subr.bf16.mxu0 0
        %1325 = vmatpush1.bf16.xpose.msra.mxu0 0
        %1326 = vmatprep.subr.bf16.mxu0 0
        %1327 = vmatpush1.bf16.xpose.msra.mxu0 0
        %1328 = vmatprep.subr.bf16.mxu0 0
        %1329 = vmatpush1.bf16.xpose.msra.mxu0 0
        %1330 = vmatprep.subr.bf16.mxu0 0
        %1331 = vmatpush1.bf16.xpose.msra.mxu0 0
        %1332 = vmatprep.subr.bf16.mxu0 0
        %1333 = vmatpush1.bf16.xpose.msra.mxu0 0
        %1334 = vmatprep.subr.bf16.mxu0 0
        %1335 = vmatpush1.bf16.xpose.msra.mxu0 0
        %1336 = vmatprep.subr.bf16.mxu0 0
        %1337 = vmatpush1.bf16.xpose.msra.mxu0 0
        %1338 = vmatprep.subr.bf16.mxu0 0
        %1339 = vmatpush1.bf16.xpose.msra.mxu0 0
        %1340 = vmatprep.subr.bf16.mxu0 0
        %1341 = vmatpush1.bf16.xpose.msra.mxu0 0
        %1342 = vmatprep.subr.bf16.mxu0 0
        %1343 = vmatpush1.bf16.xpose.msra.mxu0 0
        %1344 = vmatprep.subr.bf16.mxu0 0
        %1345 = vmatpush1.bf16.xpose.msra.mxu0 0
        %1346 = vmatprep.subr.bf16.mxu0 0
        %1347 = vmatpush1.bf16.xpose.msra.mxu0 0
        %1348 = vmatprep.subr.bf16.mxu0 0
        %1349 = vmatpush1.bf16.xpose.msra.mxu0 0
        %1350 = vmatprep.subr.bf16.mxu0 0
        %1351 = vmatpush1.bf16.xpose.msra.mxu0 0
        %1352 = vmatprep.subr.bf16.mxu0 0
        %1353 = vmatpush1.bf16.xpose.msra.mxu0 0
        %1354 = vmatprep.mubr.bf16.mxu0 0
        %1355 = vmatmul.mubr.bf16.gmra.mrb[0].mxu0 %v1317
        %v1356 = vpop.f32.mrb[0].mxu0
        %v1357 = vadd.f32 0.0, %v1356
        %v1358 = vpop.f32.mrb[0].mxu0
        %v1359 = vpop.f32.mrb[0].mxu0
        %v1360 = vpop.f32.mrb[0].mxu0
        %1361 = vdwg.mxu0
        %v1362 = vsel %vm567, %v1357, -inf
        %1363 = vmax.xlane.f32.xlu0 %v1362
        %v1364 = vpop.xlane.xlu0 %1363
        %v1365 = vsub.f32 %v1357, %v1364
        %v1366 = vmul.f32 %v1365, 1.442695
        %v1367 = vpow.pop %v1366
        %v1368 = vsel %vm567, %v1367, 0.0
        %1369 = vadd.xlane.f32.xlu0 %v1368
        %v1370 = vpop.xlane.xlu0 %1369
        %v1371 = vrcp.pop %v1370
        %v1372 = vmul.f32 %v1367, %v1371
        %v1373 = vpack.c.bf16 %v1372, %v1372
        %s1374 = scalar_lea.vmem %s403, 24 [#allocation14]
        %1375 = vst.msk [vmem:[%s1374] sm:$0xf] %vm626, %v1373
        %1376 = vrot.lane.b32.xlu0 %v1313, 16
        %v1377 = vpop.permute.xlu0 %1376
        %v1379 = vsel %vm567, %v1373, 0
        %v1382 = vsel %vm636, %v1377, 0
        %1384 = vmatprep.subr.bf16.mxu0 0
        %1385 = vmatpush1.bf16.msra.mxu0 %v1382
        %1386 = vmatprep.subr.bf16.mxu0 0
        %1387 = vmatpush1.bf16.msra.mxu0 0
        %1388 = vmatprep.subr.bf16.mxu0 0
        %1389 = vmatpush1.bf16.msra.mxu0 0
        %1390 = vmatprep.subr.bf16.mxu0 0
        %1391 = vmatpush1.bf16.msra.mxu0 0
        %1392 = vmatprep.subr.bf16.mxu0 0
        %1393 = vmatpush1.bf16.msra.mxu0 0
        %1394 = vmatprep.subr.bf16.mxu0 0
        %1395 = vmatpush1.bf16.msra.mxu0 0
        %1396 = vmatprep.subr.bf16.mxu0 0
        %1397 = vmatpush1.bf16.msra.mxu0 0
        %1398 = vmatprep.subr.bf16.mxu0 0
        %1399 = vmatpush1.bf16.msra.mxu0 0
        %1400 = vmatprep.subr.bf16.mxu0 0
        %1401 = vmatpush1.bf16.msra.mxu0 0
        %1402 = vmatprep.subr.bf16.mxu0 0
        %1403 = vmatpush1.bf16.msra.mxu0 0
        %1404 = vmatprep.subr.bf16.mxu0 0
        %1405 = vmatpush1.bf16.msra.mxu0 0
        %1406 = vmatprep.subr.bf16.mxu0 0
        %1407 = vmatpush1.bf16.msra.mxu0 0
        %1408 = vmatprep.subr.bf16.mxu0 0
        %1409 = vmatpush1.bf16.msra.mxu0 0
        %1410 = vmatprep.subr.bf16.mxu0 0
        %1411 = vmatpush1.bf16.msra.mxu0 0
        %1412 = vmatprep.subr.bf16.mxu0 0
        %1413 = vmatpush1.bf16.msra.mxu0 0
        %1414 = vmatprep.subr.bf16.mxu0 0
        %1415 = vmatpush1.bf16.msra.mxu0 0
        %1416 = vmatprep.mubr.bf16.mxu0 0
        %1417 = vmatmul.mubr.bf16.gmra.mrb[0].mxu0 %v1379
        %v1418 = vpop.f32.mrb[0].mxu0
        %v1419 = vadd.f32 0.0, %v1418
        %v1420 = vpop.f32.mrb[0].mxu0
        %v1421 = vpop.f32.mrb[0].mxu0
        %v1422 = vpop.f32.mrb[0].mxu0
        %1423 = vdwg.mxu0
        %v1424 = vpack.c.bf16 %v1419, %v1419
        %v1426 = vunpack.c.l.b16 %v1424
        %v1427 = vpack.c.b16 %v1426, %v1426
        %1428 = vrot.lane.b32.xlu0 %v1427, 48
        %v1429 = vpop.permute.xlu0 %1428
        %vm1431 = vcmask 454016
        %1432 = vst.msk [vmem:[#allocation3] sm:$0xf] %vm1431, %v1429
        %v1433 = vld [vmem:[#allocation2] sm:$0xf]
        %1434 = vrot.lane.b32.xlu0 %v565, 72
        %v1435 = vpop.permute.xlu0 %1434
        %v1437 = vunpack.c.l.b16 %v1433
        %v1438 = vpack.c.b16 %v1437, %v1437
        %1439 = vrot.lane.b32.xlu0 %v1438, 72
        %v1440 = vpop.permute.xlu0 %1439
        %v1442 = vsel %vm567, %v1435, 0
        %v1445 = vsel %vm567, %v1440, 0
        %1447 = vmatprep.subr.bf16.mxu0 0
        %1448 = vmatpush1.bf16.xpose.msra.mxu0 %v1445
        %1449 = vmatprep.subr.bf16.mxu0 0
        %1450 = vmatpush1.bf16.xpose.msra.mxu0 0
        %1451 = vmatprep.subr.bf16.mxu0 0
        %1452 = vmatpush1.bf16.xpose.msra.mxu0 0
        %1453 = vmatprep.subr.bf16.mxu0 0
        %1454 = vmatpush1.bf16.xpose.msra.mxu0 0
        %1455 = vmatprep.subr.bf16.mxu0 0
        %1456 = vmatpush1.bf16.xpose.msra.mxu0 0
        %1457 = vmatprep.subr.bf16.mxu0 0
        %1458 = vmatpush1.bf16.xpose.msra.mxu0 0
        %1459 = vmatprep.subr.bf16.mxu0 0
        %1460 = vmatpush1.bf16.xpose.msra.mxu0 0
        %1461 = vmatprep.subr.bf16.mxu0 0
        %1462 = vmatpush1.bf16.xpose.msra.mxu0 0
        %1463 = vmatprep.subr.bf16.mxu0 0
        %1464 = vmatpush1.bf16.xpose.msra.mxu0 0
        %1465 = vmatprep.subr.bf16.mxu0 0
        %1466 = vmatpush1.bf16.xpose.msra.mxu0 0
        %1467 = vmatprep.subr.bf16.mxu0 0
        %1468 = vmatpush1.bf16.xpose.msra.mxu0 0
        %1469 = vmatprep.subr.bf16.mxu0 0
        %1470 = vmatpush1.bf16.xpose.msra.mxu0 0
        %1471 = vmatprep.subr.bf16.mxu0 0
        %1472 = vmatpush1.bf16.xpose.msra.mxu0 0
        %1473 = vmatprep.subr.bf16.mxu0 0
        %1474 = vmatpush1.bf16.xpose.msra.mxu0 0
        %1475 = vmatprep.subr.bf16.mxu0 0
        %1476 = vmatpush1.bf16.xpose.msra.mxu0 0
        %1477 = vmatprep.subr.bf16.mxu0 0
        %1478 = vmatpush1.bf16.xpose.msra.mxu0 0
        %1479 = vmatprep.mubr.bf16.mxu0 0
        %1480 = vmatmul.mubr.bf16.gmra.mrb[0].mxu0 %v1442
        %v1481 = vpop.f32.mrb[0].mxu0
        %v1482 = vadd.f32 0.0, %v1481
        %v1483 = vpop.f32.mrb[0].mxu0
        %v1484 = vpop.f32.mrb[0].mxu0
        %v1485 = vpop.f32.mrb[0].mxu0
        %1486 = vdwg.mxu0
        %v1487 = vsel %vm567, %v1482, -inf
        %1488 = vmax.xlane.f32.xlu0 %v1487
        %v1489 = vpop.xlane.xlu0 %1488
        %v1490 = vsub.f32 %v1482, %v1489
        %v1491 = vmul.f32 %v1490, 1.442695
        %v1492 = vpow.pop %v1491
        %v1493 = vsel %vm567, %v1492, 0.0
        %1494 = vadd.xlane.f32.xlu0 %v1493
        %v1495 = vpop.xlane.xlu0 %1494
        %v1496 = vrcp.pop %v1495
        %v1497 = vmul.f32 %v1492, %v1496
        %v1498 = vpack.c.bf16 %v1497, %v1497
        %s1499 = scalar_lea.vmem %s403, 28 [#allocation14]
        %1500 = vst.msk [vmem:[%s1499] sm:$0xf] %vm626, %v1498
        %1501 = vrot.lane.b32.xlu0 %v1438, 8
        %v1502 = vpop.permute.xlu0 %1501
        %v1504 = vsel %vm567, %v1498, 0
        %v1507 = vsel %vm636, %v1502, 0
        %1509 = vmatprep.subr.bf16.mxu0 0
        %1510 = vmatpush1.bf16.msra.mxu0 %v1507
        %1511 = vmatprep.subr.bf16.mxu0 0
        %1512 = vmatpush1.bf16.msra.mxu0 0
        %1513 = vmatprep.subr.bf16.mxu0 0
        %1514 = vmatpush1.bf16.msra.mxu0 0
        %1515 = vmatprep.subr.bf16.mxu0 0
        %1516 = vmatpush1.bf16.msra.mxu0 0
        %1517 = vmatprep.subr.bf16.mxu0 0
        %1518 = vmatpush1.bf16.msra.mxu0 0
        %1519 = vmatprep.subr.bf16.mxu0 0
        %1520 = vmatpush1.bf16.msra.mxu0 0
        %1521 = vmatprep.subr.bf16.mxu0 0
        %1522 = vmatpush1.bf16.msra.mxu0 0
        %1523 = vmatprep.subr.bf16.mxu0 0
        %1524 = vmatpush1.bf16.msra.mxu0 0
        %1525 = vmatprep.subr.bf16.mxu0 0
        %1526 = vmatpush1.bf16.msra.mxu0 0
        %1527 = vmatprep.subr.bf16.mxu0 0
        %1528 = vmatpush1.bf16.msra.mxu0 0
        %1529 = vmatprep.subr.bf16.mxu0 0
        %1530 = vmatpush1.bf16.msra.mxu0 0
        %1531 = vmatprep.subr.bf16.mxu0 0
        %1532 = vmatpush1.bf16.msra.mxu0 0
        %1533 = vmatprep.subr.bf16.mxu0 0
        %1534 = vmatpush1.bf16.msra.mxu0 0
        %1535 = vmatprep.subr.bf16.mxu0 0
        %1536 = vmatpush1.bf16.msra.mxu0 0
        %1537 = vmatprep.subr.bf16.mxu0 0
        %1538 = vmatpush1.bf16.msra.mxu0 0
        %1539 = vmatprep.subr.bf16.mxu0 0
        %1540 = vmatpush1.bf16.msra.mxu0 0
        %1541 = vmatprep.mubr.bf16.mxu0 0
        %1542 = vmatmul.mubr.bf16.gmra.mrb[0].mxu0 %v1504
        %v1543 = vpop.f32.mrb[0].mxu0
        %v1544 = vadd.f32 0.0, %v1543
        %v1545 = vpop.f32.mrb[0].mxu0
        %v1546 = vpop.f32.mrb[0].mxu0
        %v1547 = vpop.f32.mrb[0].mxu0
        %1548 = vdwg.mxu0
        %v1549 = vpack.c.bf16 %v1544, %v1544
        %v1551 = vunpack.c.l.b16 %v1549
        %v1552 = vpack.c.b16 %v1551, %v1551
        %1553 = vrot.lane.b32.xlu0 %v1552, 56
        %v1554 = vpop.permute.xlu0 %1553
        %vm1556 = vcmask 519616
        %1557 = vst.msk [vmem:[#allocation3] sm:$0xf] %vm1556, %v1554
        %v1558 = vld [vmem:[#allocation3] sm:$0xf]
        %v1559 = vld [vmem:[#allocation12] sm:$0xf]
        %v1560 = vld [vmem:[#allocation12 + $0x4] sm:$0xf]
        %v1561 = vld [vmem:[#allocation12 + $0x8] sm:$0xf]
        %v1562 = vld [vmem:[#allocation12 + $0xc] sm:$0xf]
        %v1563 = vld [vmem:[#allocation12 + $0x10] sm:$0xf]
        %v1564 = vld [vmem:[#allocation12 + $0x14] sm:$0xf]
        %v1565 = vld [vmem:[#allocation12 + $0x18] sm:$0xf]
        %v1566 = vld [vmem:[#allocation12 + $0x1c] sm:$0xf]
        %v1567 = vld [vmem:[%s5] sm:$0x1]
        %v1569 = vlaneseq
        %v1570 = vshrl.u32 %v1569, 7
        %v1571 = vsub.s32 0, %v1570
        %v1572 = vrot.slane %v1567, %v1571
        %v1582 = vunpack.c.l.b16 %v1559
        %v1583 = vunpack.c.l.b16 %v1560
        %v1584 = vunpack.c.l.b16 %v1561
        %v1585 = vunpack.c.l.b16 %v1562
        %v1586 = vunpack.c.l.b16 %v1563
        %v1587 = vunpack.c.l.b16 %v1564
        %v1588 = vunpack.c.l.b16 %v1565
        %v1589 = vunpack.c.l.b16 %v1566
        %v1590 = vpack.c.b16 %v1583, %v1582
        %v1591 = vpack.c.b16 %v1585, %v1584
        %v1592 = vpack.c.b16 %v1587, %v1586
        %v1593 = vpack.c.b16 %v1589, %v1588
        %v1599 = vsel %vm521, %v1558, 0
        %1601 = vmatprep.subr.bf16.mxu0 0
        %1602 = vmatpush1.bf16.msra.mxu0 %v1590
        %1603 = vmatprep.subr.bf16.mxu0 0
        %1604 = vmatpush1.bf16.msra.mxu0 %v1591
        %1605 = vmatprep.subr.bf16.mxu0 0
        %1606 = vmatpush1.bf16.msra.mxu0 %v1592
        %1607 = vmatprep.subr.bf16.mxu0 0
        %1608 = vmatpush1.bf16.msra.mxu0 %v1593
        %1609 = vmatprep.subr.bf16.mxu0 0
        %1610 = vmatpush1.bf16.msra.mxu0 0
        %1611 = vmatprep.subr.bf16.mxu0 0
        %1612 = vmatpush1.bf16.msra.mxu0 0
        %1613 = vmatprep.subr.bf16.mxu0 0
        %1614 = vmatpush1.bf16.msra.mxu0 0
        %1615 = vmatprep.subr.bf16.mxu0 0
        %1616 = vmatpush1.bf16.msra.mxu0 0
        %1617 = vmatprep.subr.bf16.mxu0 0
        %1618 = vmatpush1.bf16.msra.mxu0 0
        %1619 = vmatprep.subr.bf16.mxu0 0
        %1620 = vmatpush1.bf16.msra.mxu0 0
        %1621 = vmatprep.subr.bf16.mxu0 0
        %1622 = vmatpush1.bf16.msra.mxu0 0
        %1623 = vmatprep.subr.bf16.mxu0 0
        %1624 = vmatpush1.bf16.msra.mxu0 0
        %1625 = vmatprep.subr.bf16.mxu0 0
        %1626 = vmatpush1.bf16.msra.mxu0 0
        %1627 = vmatprep.subr.bf16.mxu0 0
        %1628 = vmatpush1.bf16.msra.mxu0 0
        %1629 = vmatprep.subr.bf16.mxu0 0
        %1630 = vmatpush1.bf16.msra.mxu0 0
        %1631 = vmatprep.subr.bf16.mxu0 0
        %1632 = vmatpush1.bf16.msra.mxu0 0
        %1633 = vmatprep.mubr.bf16.mxu0 0
        %1634 = vmatmul.mubr.bf16.gmra.mrb[0].mxu0 %v1599
        %v1635 = vpop.f32.mrb[0].mxu0
        %v1636 = vadd.f32 %v1572, %v1635
        %v1637 = vpop.f32.mrb[0].mxu0
        %v1638 = vpop.f32.mrb[0].mxu0
        %v1639 = vpop.f32.mrb[0].mxu0
        %1640 = vdwg.mxu0
        %1641 = vst.msk [vmem:[%s396] sm:$0xff] %vm521, %v1636
        %s1642 = sand.u32 %s192, 1
        %s1643 = scalar_lea.sflag [#allocation6], %s1642
        %s1644 = sand.u32 %s192, 1
        %s1645 = smul.addr %s1644, 8
        %s1646 = scalar_lea.vmem [#allocation13], %s1645
        %s1647 = sand.u32 %s220, 1
        %s1648 = scalar_lea.sflag [#allocation15], %s1647
        %s1649 = sand.u32 %s220, 1
        %s1650 = smul.addr %s1649, 32
        %s1651 = scalar_lea.vmem [#allocation14], %s1650
        // Predicated region
        $region69: #{tpu_custom_call.1} parent=43 // pred_check
          %p1652 = pneg %p202
        $region70: #{tpu_custom_call.1} parent=43 // pred_check_branch
          %1654 = sbr.rel (%p1652) target = $region72
        $region71: #{tpu_custom_call.1} parent=43 // pred_region
          %s1656 = ssub.s32 128, 128
          %1657 = vsyncadd %s1643, %s1656
          %s1658 = sadd.s32 %s37, %s36
          %s1659 = smul.addr %s1658, 128
          %s1660 = scalar_lea.hbm %s6, %s1659
          %s1662 = sshll.u32 %s1646, 4
          %s1663 = int_to_ptr.vmem [resolvable:$true] %s1662
          %1665 = dma.vmem_to_hbm [thread:$0]  %s1663, 128, %s1660, %s1643
        $region72: #{tpu_custom_call.1} parent=43 // pred_fallthru
          _
        // Predicated region
        $region73: #{tpu_custom_call.1} parent=43 // pred_check
          %p1666 = pneg %p230
        $region74: #{tpu_custom_call.1} parent=43 // pred_check_branch
          %1668 = sbr.rel (%p1666) target = $region76
        $region75: #{tpu_custom_call.1} parent=43 // pred_region
          %s1670 = ssub.s32 512, 512
          %1671 = vsyncadd %s1648, %s1670
          %s1672 = smul.addr %s36, 8
          %s1673 = sadd.s32 %s37, %s1672
          %s1674 = smul.addr %s1673, 64
          %s1675 = scalar_lea.hbm %s7, %s1674
          %s1676 = sshll.u32 %s1651, 4
          %s1677 = int_to_ptr.vmem [resolvable:$true] %s1676
          %1682 = dma.vmem_to_hbm [thread:$0]  %s1677, 512, %s1675, %s1648, 64, 64, 4
        $region76: #{tpu_custom_call.1} parent=43 // pred_fallthru
          _
      $region44: #{tpu_custom_call.1} parent=5 // pred_fallthru
        _
      %p1683 = scmp.le.s32.totalorder 2, %s27
      // Predicated region
      $region77: #{tpu_custom_call.1} parent=5 // pred_check
        %p1684 = pneg %p1683
      $region78: #{tpu_custom_call.1} parent=5 // pred_check_branch
        %1686 = sbr.rel (%p1684) target = $region80
      $region79: #{tpu_custom_call.1} parent=5 // pred_region
        %s1687 = ssub.s32 %s27, 2
        // Predicated region
        $region81: #{tpu_custom_call.1} parent=79 // pred_check
          %p1688 = pneg %p208
        $region82: #{tpu_custom_call.1} parent=79 // pred_check_branch
          %1690 = sbr.rel (%p1688) target = $region84
        $region83: #{tpu_custom_call.1} parent=79 // pred_region
          %s1691 = sand.u32 %s193, 1
          %s1692 = scalar_lea.sflag [#allocation6], %s1691
          %s1693 = sand.u32 %s193, 1
          %s1694 = smul.addr %s1693, 8
          %s1695 = scalar_lea.vmem [#allocation13], %s1694
          %1696 = dma.done %s1692, 128
        $region84: #{tpu_custom_call.1} parent=79 // pred_fallthru
          _
        // Predicated region
        $region85: #{tpu_custom_call.1} parent=79 // pred_check
          %p1697 = pneg %p236
        $region86: #{tpu_custom_call.1} parent=79 // pred_check_branch
          %1699 = sbr.rel (%p1697) target = $region88
        $region87: #{tpu_custom_call.1} parent=79 // pred_region
          %s1700 = sand.u32 %s221, 1
          %s1701 = scalar_lea.sflag [#allocation15], %s1700
          %s1702 = sand.u32 %s221, 1
          %s1703 = smul.addr %s1702, 32
          %s1704 = scalar_lea.vmem [#allocation14], %s1703
          %1705 = dma.done %s1701, 512
        $region88: #{tpu_custom_call.1} parent=79 // pred_fallthru
          _
      $region80: #{tpu_custom_call.1} parent=5 // pred_fallthru
        _
    $region6: #{tpu_custom_call.1} parent=1 // loop_footer
      %s31 = sadd.s32 1, %s27
    $region7: #{tpu_custom_call.1} parent=1 // loop_footer_branch
      %26 = sbr.rel target = $region3
    $region8: #{tpu_custom_call.1} parent=1 // loop_exit
      _
    %1706 = vsyncpa [#allocation5], 1
    %s1707 = scalar_lea.sflag [#allocation5], 1
    %1708 = vsyncpa %s1707, 1
    %1709 = vsyncpa [#allocation8], 1
    %s1710 = scalar_lea.sflag [#allocation8], 1
    %1711 = vsyncpa %s1710, 1
    %1712 = vsyncpa [#allocation11], 1
    %1713 = vsyncpa [#allocation6], 1
    %s1714 = scalar_lea.sflag [#allocation6], 1
    %1715 = vsyncpa %s1714, 1
    %1716 = vsyncpa [#allocation15], 1
    %s1717 = scalar_lea.sflag [#allocation15], 1
    %1718 = vsyncpa %s1717, 1

</llo_original>
